<compile_context>
chip_gen: v6e
topology: v6e:2x2x1
jax: 0.10.0
libtpu: 0.0.40
codegen_flags: <defaults>
</compile_context>

<pallas_src>
import jax
import jax.numpy as jnp
import numpy as np
from jax.experimental import pallas as pl
from jax.experimental.pallas import tpu as pltpu


# ---------------------------------------------------------------------------
# Pallas kernel: one batch-block (Bblk batch elements) per grid step.
#
# Inputs:
#   x_ref   : (Bblk, HW, C)   tokens (no CLS, no pos-emb), compute dtype
#   qb_ref  : (1, C)  f32     (pos[0] @ Wq^T + bq) * scale
#   pkc_ref : (1, C)  f32     pos[0]  @ Wk^T + bk
#   pkr_ref : (HW, C) f32     pos[1:] @ Wk^T + bk
#   pvc_ref : (1, C)  f32     pos[0]  @ Wv^T + bv
#   pvr_ref : (HW, C) f32     pos[1:] @ Wv^T + bv
#   g_ref   : (C, H)  f32     head-indicator matrix  G[c,h] = 1 iff lane c in head h
#   gt_ref  : (H, C)  f32     G^T
#   wq_ref  : (C, C)          Wq^T * scale          (compute dtype)
#   wk_ref  : (C, C)          Wk^T                  (compute dtype)
#   wv_ref  : (C, C)          Wv^T                  (compute dtype)
#   wc_ref  : (C, OUT_pad)    Wc^T (zero-padded)    (compute dtype)
#   lb_ref  : (1, OUT_pad) f32  bv @ Wc^T + bc (zero-padded)
#   bc_ref  : (1, OUT_pad) f32  bc (zero-padded)
# Outputs:
#   pooled_ref : (Bblk, OUT_pad)     f32
#   local_ref  : (Bblk*HW, OUT_pad)  local dtype (compute dtype by default)
# ---------------------------------------------------------------------------
def _attnpool_kernel(x_ref, qb_ref, pkc_ref, pkr_ref, pvc_ref, pvr_ref,
                     g_ref, gt_ref, wq_ref, wk_ref, wv_ref, wc_ref,
                     lb_ref, bc_ref, pooled_ref, local_ref):
    f32 = jnp.float32
    bblk, hw, c = x_ref.shape
    num_heads = g_ref.shape[1]

    x = x_ref[...]                                  # (Bblk, HW, C)
    xflat = x.reshape(bblk * hw, c)                 # (Bblk*HW, C)

    wv = wv_ref[...]
    wk = wk_ref[...]
    wc = wc_ref[...]

    # ---- shared projections (biases folded into the hoisted constants) ----
    xv = jnp.dot(xflat, wv, preferred_element_type=f32)      # (Bblk*HW, C) f32
    xk = jnp.dot(xflat, wk, preferred_element_type=f32)      # (Bblk*HW, C) f32

    # ---- local features: (x @ Wv^T) @ Wc^T + (bv @ Wc^T + bc) --------------
    local = jnp.dot(xv.astype(wc.dtype), wc,
                    preferred_element_type=f32) + lb_ref[...]
    local_ref[...] = local.astype(local_ref.dtype)           # lane-dense store

    # ---- per-batch CLS (query) token pieces --------------------------------
    inv_hw = 1.0 / hw
    xv3 = xv.reshape(bblk, hw, c)
    xk3 = xk.reshape(bblk, hw, c)
    k_cls = xk3.sum(axis=1) * inv_hw + pkc_ref[...]           # (Bblk, C)
    v_cls = xv3.sum(axis=1) * inv_hw + pvc_ref[...]           # (Bblk, C)

    mean_x = x.astype(f32).sum(axis=1) * inv_hw               # (Bblk, C)
    q = jnp.dot(mean_x.astype(wq_ref.dtype), wq_ref[...],     # scale folded in
                preferred_element_type=f32) + qb_ref[...]     # (Bblk, C)

    # ---- head-vectorised single-query attention ----------------------------
    G = g_ref[...]                                            # (C, H)
    GT = gt_ref[...]                                          # (H, C)

    s_cls = jnp.dot(q * k_cls, G, preferred_element_type=f32)        # (Bblk, H)
    qk_rows = (q[:, None, :] * (xk3 + pkr_ref[...][None])).reshape(bblk * hw, c)
    s_rows = jnp.dot(qk_rows, G,
                     preferred_element_type=f32).reshape(bblk, hw, num_heads)

    m = jnp.maximum(jnp.max(s_rows, axis=1), s_cls)                   # (Bblk, H)
    e_cls = jnp.exp(s_cls - m)
    e_rows = jnp.exp(s_rows - m[:, None, :])
    denom = e_cls + jnp.sum(e_rows, axis=1)
    inv = 1.0 / denom                              # exact: keeps f32 rtol<=1e-4

    w_cls = jnp.dot(e_cls * inv, GT, preferred_element_type=f32)      # (Bblk, C)
    w_rows = jnp.dot((e_rows * inv[:, None, :]).reshape(bblk * hw, num_heads),
                     GT, preferred_element_type=f32).reshape(bblk, hw, c)

    v_rows = xv3 + pvr_ref[...][None]                                 # (Bblk, HW, C)
    attn = w_cls * v_cls + jnp.sum(w_rows * v_rows, axis=1)           # (Bblk, C)
    pooled = jnp.dot(attn.astype(wc.dtype), wc,
                     preferred_element_type=f32) + bc_ref[...]        # (Bblk, OUT_pad)
    pooled_ref[...] = pooled.astype(pooled_ref.dtype)


def _pick_batch_block(b, hw, const_bytes, step_bytes_fn, budget_bytes):
    """VMEM- and alignment-aware batch-block size.

    Only returns blocks that satisfy the (8,128) sublane rule on the output
    BlockSpecs (bblk % 8 == 0 and bblk*hw % 8 == 0, or the full batch), and
    prefers >= 2 grid steps (v7x megacore sharding + DMA/compute overlap),
    ideally >= 4 while keeping the MXU M dimension reasonable.
    """
    def aligned(d):
        return d == b or (d % 8 == 0 and (d * hw) % 8 == 0)

    divs = [d for d in range(1, b + 1) if b % d == 0 and aligned(d)]
    fits = [d for d in divs if const_bytes + step_bytes_fn(d) <= budget_bytes]
    if not fits:
        return min(divs)                   # smallest aligned block; best effort
    multi = [d for d in fits if d < b]
    if multi:
        deep = [d for d in multi if b // d >= 4 and d * hw >= 128]
        if deep:
            return max(deep)               # >=4 steps, still >=128 MXU rows
        wide = [d for d in multi if d * hw >= 64]
        if wide:
            return max(wide)               # >=2 steps
    return max(fits)                       # fall back to one fat step


def attention_pool_2d(x_nchw, params, num_heads, *,
                      compute_dtype=jnp.float32, local_dtype=None):
    """Forward pass of AttentionPool2d.  x_nchw: (B, C, H, W).

    compute_dtype=jnp.bfloat16 is recommended on v6e/v7x at real CLIP sizes
    (halves weight VMEM / local-output traffic; accumulation + softmax stay in
    f32).  local_dtype defaults to compute_dtype.
    """
    b, c, h, w = x_nchw.shape
    hw = h * w
    head_dim = c // num_heads
    scale = float(head_dim) ** -0.5
    out_dim = params["wc"].shape[0]
    f32 = jnp.float32
    if local_dtype is None:
        local_dtype = compute_dtype

    Wq, Wk, Wv, Wc = (params[k].astype(f32) for k in ("wq", "wk", "wv", "wc"))
    bq, bk, bv, bc = (params[k].astype(f32) for k in ("bq", "bk", "bv", "bc"))
    pos = params["pos"].astype(f32)                  # (HW+1, C)

    # ---- batch-invariant terms hoisted out of the kernel (plain XLA) -------
    pos_k = pos @ Wk.T + bk                          # (L, C)
    pos_v = pos @ Wv.T + bv                          # (L, C)
    q_bias = (pos[0:1] @ Wq.T + bq) * scale          # (1, C), scale folded in
    local_bias = (bv @ Wc.T + bc).reshape(1, out_dim)

    # Lane-dense output width; skip padding entirely when already aligned.
    if out_dim % 128 == 0:
        out_pad = out_dim
        wc_t = Wc.T
        lb_pad = local_bias
        bc_pad = bc.reshape(1, out_dim)
    else:
        out_pad = ((out_dim + 127) // 128) * 128
        wc_t = jnp.zeros((c, out_pad), f32).at[:, :out_dim].set(Wc.T)
        lb_pad = jnp.zeros((1, out_pad), f32).at[:, :out_dim].set(local_bias)
        bc_pad = jnp.zeros((1, out_pad), f32).at[:, :out_dim].set(
            bc.reshape(1, out_dim))

    wq_t = (Wq.T * scale).astype(compute_dtype)
    wk_t = Wk.T.astype(compute_dtype)
    wv_t = Wv.T.astype(compute_dtype)
    wc_t = wc_t.astype(compute_dtype)

    # Head-indicator matrices, hoisted out of the kernel (small, f32 exact).
    g_np = (np.arange(c)[:, None] // head_dim ==
            np.arange(num_heads)[None, :]).astype(np.float32)
    G = jnp.asarray(g_np)                            # (C, H)
    GT = jnp.asarray(g_np.T)                         # (H, C)

    # glue: NCHW -> (B, HW, C)
    x_seq = jnp.transpose(x_nchw.reshape(b, c, hw), (0, 2, 1)).astype(compute_dtype)

    # ---- VMEM plan: resident constants + per-step footprint ----------------
    cd_size = np.dtype(compute_dtype).itemsize
    loc_size = np.dtype(local_dtype).itemsize
    const_bytes = ((3 * c * c + c * out_pad) * cd_size        # Wq/Wk/Wv/Wc
                   + 2 * c * num_heads * 4                    # G, GT
                   + (3 * c + 2 * hw * c + 2 * out_pad) * 4)  # bias / pos rows

    def step_bytes(d):
        rows = d * hw
        return (2 * rows * c * cd_size                 # x tile (double-buffered)
                + 2 * rows * out_pad * loc_size        # local out (double-buffered)
                + 2 * d * out_pad * 4                  # pooled out (double-buffered)
                + 7 * rows * c * 4                     # f32 intermediates
                + rows * out_pad * 4)                  # f32 local before store cast

    budget = 40 << 20                                  # conservative across gens
    bblk = _pick_batch_block(b, hw, const_bytes, step_bytes, budget)
    nsteps = b // bblk
    vmem_limit = int(min(56 << 20,
                         max(32 << 20,
                             1.25 * (const_bytes + step_bytes(bblk)))))

    # Advisory cost estimate so XLA schedules surrounding ops sensibly.
    rows_tot = b * hw
    cost = pl.CostEstimate(
        flops=int(2 * rows_tot * c * (2 * c + out_pad)
                  + 2 * b * c * (c + out_pad)
                  + 4 * b * (hw + 1) * c * num_heads),
        transcendentals=int(b * (hw + 1) * num_heads),
        bytes_accessed=int(rows_tot * c * cd_size + const_bytes
                           + rows_tot * out_pad * loc_size + b * out_pad * 4),
    )

    const2 = lambda i: (0, 0)

    def cspec(shape):
        # Constant across the grid -> single-buffer (halves weight VMEM).
        return pl.BlockSpec(shape, const2, pipeline_mode=pl.Buffered(1))

    pooled_pad, local_out = pl.pallas_call(
        _attnpool_kernel,
        out_shape=(
            jax.ShapeDtypeStruct((b, out_pad), f32),
            jax.ShapeDtypeStruct((b * hw, out_pad), local_dtype),
        ),
        grid=(nsteps,),
        in_specs=[
            pl.BlockSpec((bblk, hw, c), lambda i: (i, 0, 0)),   # x tokens
            cspec((1, c)),                                      # q bias (scaled)
            cspec((1, c)),                                      # pos_k CLS
            cspec((hw, c)),                                     # pos_k rows
            cspec((1, c)),                                      # pos_v CLS
            cspec((hw, c)),                                     # pos_v rows
            cspec((c, num_heads)),                              # G
            cspec((num_heads, c)),                              # G^T
            cspec((c, c)),                                      # Wq^T * scale
            cspec((c, c)),                                      # Wk^T
            cspec((c, c)),                                      # Wv^T
            cspec((c, out_pad)),                                # Wc^T (padded)
            cspec((1, out_pad)),                                # local bias
            cspec((1, out_pad)),                                # bc
        ],
        out_specs=(
            pl.BlockSpec((bblk, out_pad), lambda i: (i, 0)),        # pooled
            pl.BlockSpec((bblk * hw, out_pad), lambda i: (i, 0)),   # local slab
        ),
        compiler_params=pltpu.CompilerParams(
            dimension_semantics=("parallel",),
            vmem_limit_bytes=vmem_limit),
        cost_estimate=cost,
    )(x_seq, q_bias, pos_k[0:1], pos_k[1:], pos_v[0:1], pos_v[1:],
      G, GT, wq_t, wk_t, wv_t, wc_t, lb_pad, bc_pad)

    pooled = pooled_pad if out_pad == out_dim else pooled_pad[:, :out_dim]
    local = local_out.reshape(b, hw, out_pad)
    if out_pad != out_dim:
        local = local[:, :, :out_dim]
    return pooled, local


# --------------------------- pure-JAX reference -----------------------------
def attention_pool_2d_ref(x_nchw, params, num_heads):
    b, c, h, w = x_nchw.shape
    hw = h * w
    hd = c // num_heads
    scale = float(hd) ** -0.5
    Wq, Wk, Wv, Wc = params["wq"], params["wk"], params["wv"], params["wc"]
    bq, bk, bv, bc = params["bq"], params["bk"], params["bv"], params["bc"]
    pos = params["pos"]

    x_local = jnp.transpose(x_nchw, (0, 2, 3, 1))                    # (b,h,w,c)
    x_local = x_local @ Wv.T + bv
    x_local = x_local @ Wc.T + bc
    x_local = x_local.reshape(b, hw, -1)

    xs = jnp.transpose(x_nchw.reshape(b, c, hw), (2, 0, 1))          # (hw,b,c)
    xs = jnp.concatenate([xs.mean(0, keepdims=True), xs], axis=0)    # (L,b,c)
    xs = xs + pos[:, None, :]

    q = (xs[0:1] @ Wq.T + bq) * scale                                # (1,b,c)
    k = xs @ Wk.T + bk
    v = xs @ Wv.T + bv
    L = xs.shape[0]
    qh = q.reshape(1, b, num_heads, hd)
    kh = k.reshape(L, b, num_heads, hd)
    vh = v.reshape(L, b, num_heads, hd)
    s = jnp.einsum("qbhd,kbhd->bhqk", qh, kh)
    p = jax.nn.softmax(s, axis=-1)
    o = jnp.einsum("bhqk,kbhd->qbhd", p, vh).reshape(1, b, c)
    pooled = (o @ Wc.T + bc)[0]                                      # (b,out)
    return pooled, x_local


# ------------------------------- main ---------------------------------------
if __name__ == "__main__":
    # Small shapes consistent with the module:
    #   batch=2, embed_dim=32 (== channels), spacial_dim=4 (H=W=4, HW=16),
    #   num_heads=4, output_dim=64.
    B, C, S = 2, 32, 4
    NUM_HEADS = 4
    OUT_DIM = 64
    HW = S * S

    key = jax.random.PRNGKey(0)
    ks = jax.random.split(key, 10)
    params = {
        "pos": jax.random.normal(ks[0], (HW + 1, C), jnp.float32) / (C ** 0.5),
        "wq": jax.random.normal(ks[1], (C, C), jnp.float32) * 0.05,
        "bq": jax.random.normal(ks[2], (C,), jnp.float32) * 0.05,
        "wk": jax.random.normal(ks[3], (C, C), jnp.float32) * 0.05,
        "bk": jax.random.normal(ks[4], (C,), jnp.float32) * 0.05,
        "wv": jax.random.normal(ks[5], (C, C), jnp.float32) * 0.05,
        "bv": jax.random.normal(ks[6], (C,), jnp.float32) * 0.05,
        "wc": jax.random.normal(ks[7], (OUT_DIM, C), jnp.float32) * 0.05,
        "bc": jax.random.normal(ks[8], (OUT_DIM,), jnp.float32) * 0.05,
    }
    x = jax.random.normal(ks[9], (B, C, S, S), jnp.float32)

    pooled_ref, local_ref = attention_pool_2d_ref(x, params, NUM_HEADS)

    # f32 path (default): tight tolerance (exact softmax reciprocal).
    pooled, local = attention_pool_2d(x, params, NUM_HEADS)
    jax.block_until_ready((pooled, local))
    assert pooled.shape == (B, OUT_DIM)
    assert local.shape == (B, HW, OUT_DIM)
    np.testing.assert_allclose(np.asarray(pooled), np.asarray(pooled_ref),
                               rtol=1e-4, atol=1e-4)
    np.testing.assert_allclose(np.asarray(local), np.asarray(local_ref),
                               rtol=1e-4, atol=1e-4)

    # bf16 compute path (v6e/v7x-friendly): looser tolerance (bf16 inputs,
    # bf16 local-feature output).
    pooled_bf, local_bf = attention_pool_2d(x, params, NUM_HEADS,
                                            compute_dtype=jnp.bfloat16)
    jax.block_until_ready((pooled_bf, local_bf))
    np.testing.assert_allclose(np.asarray(pooled_bf.astype(jnp.float32)),
                               np.asarray(pooled_ref), rtol=2e-2, atol=2e-2)
    np.testing.assert_allclose(np.asarray(local_bf.astype(jnp.float32)),
                               np.asarray(local_ref), rtol=2e-2, atol=2e-2)

    print("KERNEL_OK")
</pallas_src>

<mosaic_0001>
module attributes {stable_mosaic.version = 11 : i64} {
  func.func @_attnpool_kernel(%arg0: i32, %arg1: memref<2x16x32xf32, #tpu.memory_space<vmem>>, %arg2: memref<1x32xf32, #tpu.memory_space<vmem>>, %arg3: memref<1x32xf32, #tpu.memory_space<vmem>>, %arg4: memref<16x32xf32, #tpu.memory_space<vmem>>, %arg5: memref<1x32xf32, #tpu.memory_space<vmem>>, %arg6: memref<16x32xf32, #tpu.memory_space<vmem>>, %arg7: memref<32x4xf32, #tpu.memory_space<vmem>>, %arg8: memref<4x32xf32, #tpu.memory_space<vmem>>, %arg9: memref<32x32xf32, #tpu.memory_space<vmem>>, %arg10: memref<32x32xf32, #tpu.memory_space<vmem>>, %arg11: memref<32x32xf32, #tpu.memory_space<vmem>>, %arg12: memref<32x128xf32, #tpu.memory_space<vmem>>, %arg13: memref<1x128xf32, #tpu.memory_space<vmem>>, %arg14: memref<1x128xf32, #tpu.memory_space<vmem>>, %arg15: memref<2x128xf32, #tpu.memory_space<vmem>>, %arg16: memref<32x128xf32, #tpu.memory_space<vmem>>) attributes {dimension_semantics = [#tpu.dimension_semantics<parallel>], iteration_bounds = array<i64: 1>, scalar_prefetch = 0 : i64, scratch_operands = 0 : i64, tpu.core_type = #tpu.core_type<tc>, window_params = [{transform_indices = @transform_0, window_bounds = array<i64: 2, 16, 32>}, {pipeline_mode = #tpu.pipeline_mode<synchronous>, transform_indices = @transform_1, window_bounds = array<i64: 1, 32>}, {pipeline_mode = #tpu.pipeline_mode<synchronous>, transform_indices = @transform_2, window_bounds = array<i64: 1, 32>}, {pipeline_mode = #tpu.pipeline_mode<synchronous>, transform_indices = @transform_3, window_bounds = array<i64: 16, 32>}, {pipeline_mode = #tpu.pipeline_mode<synchronous>, transform_indices = @transform_4, window_bounds = array<i64: 1, 32>}, {pipeline_mode = #tpu.pipeline_mode<synchronous>, transform_indices = @transform_5, window_bounds = array<i64: 16, 32>}, {pipeline_mode = #tpu.pipeline_mode<synchronous>, transform_indices = @transform_6, window_bounds = array<i64: 32, 4>}, {pipeline_mode = #tpu.pipeline_mode<synchronous>, transform_indices = @transform_7, window_bounds = array<i64: 4, 32>}, {pipeline_mode = #tpu.pipeline_mode<synchronous>, transform_indices = @transform_8, window_bounds = array<i64: 32, 32>}, {pipeline_mode = #tpu.pipeline_mode<synchronous>, transform_indices = @transform_9, window_bounds = array<i64: 32, 32>}, {pipeline_mode = #tpu.pipeline_mode<synchronous>, transform_indices = @transform_10, window_bounds = array<i64: 32, 32>}, {pipeline_mode = #tpu.pipeline_mode<synchronous>, transform_indices = @transform_11, window_bounds = array<i64: 32, 128>}, {pipeline_mode = #tpu.pipeline_mode<synchronous>, transform_indices = @transform_12, window_bounds = array<i64: 1, 128>}, {pipeline_mode = #tpu.pipeline_mode<synchronous>, transform_indices = @transform_13, window_bounds = array<i64: 1, 128>}, {transform_indices = @transform_14, window_bounds = array<i64: 2, 128>}, {transform_indices = @transform_15, window_bounds = array<i64: 32, 128>}]} {
    %c0 = arith.constant 0 : index
    %c0_0 = arith.constant 0 : index
    %c0_1 = arith.constant 0 : index
    %0 = vector.load %arg1[%c0, %c0_0, %c0_1] : memref<2x16x32xf32, #tpu.memory_space<vmem>>, vector<2x16x32xf32>
    %1 = vector.shape_cast %0 : vector<2x16x32xf32> to vector<32x32xf32>
    %c0_2 = arith.constant 0 : index
    %c0_3 = arith.constant 0 : index
    %2 = vector.load %arg11[%c0_2, %c0_3] : memref<32x32xf32, #tpu.memory_space<vmem>>, vector<32x32xf32>
    %c0_4 = arith.constant 0 : index
    %c0_5 = arith.constant 0 : index
    %3 = vector.load %arg10[%c0_4, %c0_5] : memref<32x32xf32, #tpu.memory_space<vmem>>, vector<32x32xf32>
    %c0_6 = arith.constant 0 : index
    %c0_7 = arith.constant 0 : index
    %4 = vector.load %arg12[%c0_6, %c0_7] : memref<32x128xf32, #tpu.memory_space<vmem>>, vector<32x128xf32>
    %cst = arith.constant dense<0.000000e+00> : vector<32x32xf32>
    %5 = tpu.matmul %1, %2, %cst {dimension_numbers = #tpu.dot_dimension_numbers<[1], [0], [0], [1], [0, 0, 1, 1], [], []>} : vector<32x32xf32>, vector<32x32xf32>, vector<32x32xf32> -> vector<32x32xf32>
    %cst_8 = arith.constant dense<0.000000e+00> : vector<32x32xf32>
    %6 = tpu.matmul %1, %3, %cst_8 {dimension_numbers = #tpu.dot_dimension_numbers<[1], [0], [0], [1], [0, 0, 1, 1], [], []>} : vector<32x32xf32>, vector<32x32xf32>, vector<32x32xf32> -> vector<32x32xf32>
    %cst_9 = arith.constant dense<0.000000e+00> : vector<32x128xf32>
    %7 = tpu.matmul %5, %4, %cst_9 {dimension_numbers = #tpu.dot_dimension_numbers<[1], [0], [0], [1], [0, 0, 1, 1], [], []>} : vector<32x32xf32>, vector<32x128xf32>, vector<32x128xf32> -> vector<32x128xf32>
    %c0_10 = arith.constant 0 : index
    %c0_11 = arith.constant 0 : index
    %8 = vector.load %arg13[%c0_10, %c0_11] : memref<1x128xf32, #tpu.memory_space<vmem>>, vector<1x128xf32>
    %9 = vector.broadcast %8 : vector<1x128xf32> to vector<32x128xf32>
    %10 = arith.addf %7, %9 : vector<32x128xf32>
    %c0_12 = arith.constant 0 : index
    %c0_13 = arith.constant 0 : index
    %11 = vector.load %arg16[%c0_12, %c0_13] : memref<32x128xf32, #tpu.memory_space<vmem>>, vector<32x128xf32>
    tpu.vector_store %arg16[%c0_12, %c0_13], %10 {strides = array<i32>} : memref<32x128xf32, #tpu.memory_space<vmem>>, vector<32x128xf32>,
    %12 = vector.shape_cast %5 : vector<32x32xf32> to vector<2x16x32xf32>
    %13 = vector.shape_cast %6 : vector<32x32xf32> to vector<2x16x32xf32>
    %cst_14 = arith.constant dense<0.000000e+00> : vector<2x32xf32>
    %14 = vector.multi_reduction <add>, %13, %cst_14 [1] : vector<2x16x32xf32> to vector<2x32xf32>
    %cst_15 = arith.constant 6.250000e-02 : f32
    %15 = vector.broadcast %cst_15 : f32 to vector<2x32xf32>
    %16 = arith.mulf %14, %15 : vector<2x32xf32>
    %c0_16 = arith.constant 0 : index
    %c0_17 = arith.constant 0 : index
    %17 = vector.load %arg3[%c0_16, %c0_17] : memref<1x32xf32, #tpu.memory_space<vmem>>, vector<1x32xf32>
    %18 = vector.broadcast %17 : vector<1x32xf32> to vector<2x32xf32>
    %19 = arith.addf %16, %18 : vector<2x32xf32>
    %cst_18 = arith.constant dense<0.000000e+00> : vector<2x32xf32>
    %20 = vector.multi_reduction <add>, %12, %cst_18 [1] : vector<2x16x32xf32> to vector<2x32xf32>
    %cst_19 = arith.constant 6.250000e-02 : f32
    %21 = vector.broadcast %cst_19 : f32 to vector<2x32xf32>
    %22 = arith.mulf %20, %21 : vector<2x32xf32>
    %c0_20 = arith.constant 0 : index
    %c0_21 = arith.constant 0 : index
    %23 = vector.load %arg5[%c0_20, %c0_21] : memref<1x32xf32, #tpu.memory_space<vmem>>, vector<1x32xf32>
    %24 = vector.broadcast %23 : vector<1x32xf32> to vector<2x32xf32>
    %25 = arith.addf %22, %24 : vector<2x32xf32>
    %cst_22 = arith.constant dense<0.000000e+00> : vector<2x32xf32>
    %26 = vector.multi_reduction <add>, %0, %cst_22 [1] : vector<2x16x32xf32> to vector<2x32xf32>
    %cst_23 = arith.constant 6.250000e-02 : f32
    %27 = vector.broadcast %cst_23 : f32 to vector<2x32xf32>
    %28 = arith.mulf %26, %27 : vector<2x32xf32>
    %c0_24 = arith.constant 0 : index
    %c0_25 = arith.constant 0 : index
    %29 = vector.load %arg9[%c0_24, %c0_25] : memref<32x32xf32, #tpu.memory_space<vmem>>, vector<32x32xf32>
    %cst_26 = arith.constant dense<0.000000e+00> : vector<2x32xf32>
    %30 = tpu.matmul %28, %29, %cst_26 {dimension_numbers = #tpu.dot_dimension_numbers<[1], [0], [0], [1], [0, 0, 1, 1], [], []>} : vector<2x32xf32>, vector<32x32xf32>, vector<2x32xf32> -> vector<2x32xf32>
    %c0_27 = arith.constant 0 : index
    %c0_28 = arith.constant 0 : index
    %31 = vector.load %arg2[%c0_27, %c0_28] : memref<1x32xf32, #tpu.memory_space<vmem>>, vector<1x32xf32>
    %32 = vector.broadcast %31 : vector<1x32xf32> to vector<2x32xf32>
    %33 = arith.addf %30, %32 : vector<2x32xf32>
    %c0_29 = arith.constant 0 : index
    %c0_30 = arith.constant 0 : index
    %34 = vector.load %arg7[%c0_29, %c0_30] : memref<32x4xf32, #tpu.memory_space<vmem>>, vector<32x4xf32>
    %c0_31 = arith.constant 0 : index
    %c0_32 = arith.constant 0 : index
    %35 = vector.load %arg8[%c0_31, %c0_32] : memref<4x32xf32, #tpu.memory_space<vmem>>, vector<4x32xf32>
    %36 = arith.mulf %33, %19 : vector<2x32xf32>
    %cst_33 = arith.constant dense<0.000000e+00> : vector<2x4xf32>
    %37 = tpu.matmul %36, %34, %cst_33 {dimension_numbers = #tpu.dot_dimension_numbers<[1], [0], [0], [1], [0, 0, 1, 1], [], []>} : vector<2x32xf32>, vector<32x4xf32>, vector<2x4xf32> -> vector<2x4xf32>
    %38 = vector.shape_cast %33 : vector<2x32xf32> to vector<2x1x32xf32>
    %c0_34 = arith.constant 0 : index
    %c0_35 = arith.constant 0 : index
    %39 = vector.load %arg4[%c0_34, %c0_35] : memref<16x32xf32, #tpu.memory_space<vmem>>, vector<16x32xf32>
    %40 = vector.shape_cast %39 : vector<16x32xf32> to vector<1x16x32xf32>
    %41 = vector.broadcast %40 : vector<1x16x32xf32> to vector<2x16x32xf32>
    %42 = arith.addf %13, %41 : vector<2x16x32xf32>
    %43 = vector.broadcast %38 : vector<2x1x32xf32> to vector<2x16x32xf32>
    %44 = arith.mulf %43, %42 : vector<2x16x32xf32>
    %45 = vector.shape_cast %44 : vector<2x16x32xf32> to vector<32x32xf32>
    %cst_36 = arith.constant dense<0.000000e+00> : vector<32x4xf32>
    %46 = tpu.matmul %45, %34, %cst_36 {dimension_numbers = #tpu.dot_dimension_numbers<[1], [0], [0], [1], [0, 0, 1, 1], [], []>} : vector<32x32xf32>, vector<32x4xf32>, vector<32x4xf32> -> vector<32x4xf32>
    %47 = vector.shape_cast %46 : vector<32x4xf32> to vector<2x16x4xf32>
    %cst_37 = arith.constant dense<0xFF800000> : vector<2x4xf32>
    %48 = vector.multi_reduction <maximumf>, %47, %cst_37 [1] : vector<2x16x4xf32> to vector<2x4xf32>
    %49 = arith.maximumf %48, %37 : vector<2x4xf32>
    %50 = arith.subf %37, %49 : vector<2x4xf32>
    %51 = math.exp %50 : vector<2x4xf32>
    %52 = vector.shape_cast %49 : vector<2x4xf32> to vector<2x1x4xf32>
    %53 = vector.broadcast %52 : vector<2x1x4xf32> to vector<2x16x4xf32>
    %54 = arith.subf %47, %53 : vector<2x16x4xf32>
    %55 = math.exp %54 : vector<2x16x4xf32>
    %cst_38 = arith.constant dense<0.000000e+00> : vector<2x4xf32>
    %56 = vector.multi_reduction <add>, %55, %cst_38 [1] : vector<2x16x4xf32> to vector<2x4xf32>
    %57 = arith.addf %51, %56 : vector<2x4xf32>
    %cst_39 = arith.constant 1.000000e+00 : f32
    %58 = vector.broadcast %cst_39 : f32 to vector<2x4xf32>
    %59 = arith.divf %58, %57 : vector<2x4xf32>
    %60 = arith.mulf %51, %59 : vector<2x4xf32>
    %cst_40 = arith.constant dense<0.000000e+00> : vector<2x32xf32>
    %61 = tpu.matmul %60, %35, %cst_40 {dimension_numbers = #tpu.dot_dimension_numbers<[1], [0], [0], [1], [0, 0, 1, 1], [], []>} : vector<2x4xf32>, vector<4x32xf32>, vector<2x32xf32> -> vector<2x32xf32>
    %62 = vector.shape_cast %59 : vector<2x4xf32> to vector<2x1x4xf32>
    %63 = vector.broadcast %62 : vector<2x1x4xf32> to vector<2x16x4xf32>
    %64 = arith.mulf %55, %63 : vector<2x16x4xf32>
    %65 = vector.shape_cast %64 : vector<2x16x4xf32> to vector<32x4xf32>
    %cst_41 = arith.constant dense<0.000000e+00> : vector<32x32xf32>
    %66 = tpu.matmul %65, %35, %cst_41 {dimension_numbers = #tpu.dot_dimension_numbers<[1], [0], [0], [1], [0, 0, 1, 1], [], []>} : vector<32x4xf32>, vector<4x32xf32>, vector<32x32xf32> -> vector<32x32xf32>
    %67 = vector.shape_cast %66 : vector<32x32xf32> to vector<2x16x32xf32>
    %c0_42 = arith.constant 0 : index
    %c0_43 = arith.constant 0 : index
    %68 = vector.load %arg6[%c0_42, %c0_43] : memref<16x32xf32, #tpu.memory_space<vmem>>, vector<16x32xf32>
    %69 = vector.shape_cast %68 : vector<16x32xf32> to vector<1x16x32xf32>
    %70 = vector.broadcast %69 : vector<1x16x32xf32> to vector<2x16x32xf32>
    %71 = arith.addf %12, %70 : vector<2x16x32xf32>
    %72 = arith.mulf %61, %25 : vector<2x32xf32>
    %73 = arith.mulf %67, %71 : vector<2x16x32xf32>
    %cst_44 = arith.constant dense<0.000000e+00> : vector<2x32xf32>
    %74 = vector.multi_reduction <add>, %73, %cst_44 [1] : vector<2x16x32xf32> to vector<2x32xf32>
    %75 = arith.addf %72, %74 : vector<2x32xf32>
    %cst_45 = arith.constant dense<0.000000e+00> : vector<2x128xf32>
    %76 = tpu.matmul %75, %4, %cst_45 {dimension_numbers = #tpu.dot_dimension_numbers<[1], [0], [0], [1], [0, 0, 1, 1], [], []>} : vector<2x32xf32>, vector<32x128xf32>, vector<2x128xf32> -> vector<2x128xf32>
    %c0_46 = arith.constant 0 : index
    %c0_47 = arith.constant 0 : index
    %77 = vector.load %arg14[%c0_46, %c0_47] : memref<1x128xf32, #tpu.memory_space<vmem>>, vector<1x128xf32>
    %78 = vector.broadcast %77 : vector<1x128xf32> to vector<2x128xf32>
    %79 = arith.addf %76, %78 : vector<2x128xf32>
    %c0_48 = arith.constant 0 : index
    %c0_49 = arith.constant 0 : index
    %80 = vector.load %arg15[%c0_48, %c0_49] : memref<2x128xf32, #tpu.memory_space<vmem>>, vector<2x128xf32>
    tpu.vector_store %arg15[%c0_48, %c0_49], %79 {strides = array<i32>} : memref<2x128xf32, #tpu.memory_space<vmem>>, vector<2x128xf32>,
    return
  }
  func.func @transform_0(%arg0: i32) -> (i32, i32, i32) {
    %c0_i32 = arith.constant 0 : i32
    %c0_i32_0 = arith.constant 0 : i32
    %c0_i32_1 = arith.constant 0 : i32
    return %arg0, %c0_i32, %c0_i32_0 : i32, i32, i32
  }
  func.func @transform_1(%arg0: i32) -> (i32, i32) {
    %c0_i32 = arith.constant 0 : i32
    %c0_i32_0 = arith.constant 0 : i32
    %c0_i32_1 = arith.constant 0 : i32
    return %c0_i32, %c0_i32_0 : i32, i32
  }
  func.func @transform_2(%arg0: i32) -> (i32, i32) {
    %c0_i32 = arith.constant 0 : i32
    %c0_i32_0 = arith.constant 0 : i32
    %c0_i32_1 = arith.constant 0 : i32
    return %c0_i32, %c0_i32_0 : i32, i32
  }
  func.func @transform_3(%arg0: i32) -> (i32, i32) {
    %c0_i32 = arith.constant 0 : i32
    %c0_i32_0 = arith.constant 0 : i32
    %c0_i32_1 = arith.constant 0 : i32
    return %c0_i32, %c0_i32_0 : i32, i32
  }
  func.func @transform_4(%arg0: i32) -> (i32, i32) {
    %c0_i32 = arith.constant 0 : i32
    %c0_i32_0 = arith.constant 0 : i32
    %c0_i32_1 = arith.constant 0 : i32
    return %c0_i32, %c0_i32_0 : i32, i32
  }
  func.func @transform_5(%arg0: i32) -> (i32, i32) {
    %c0_i32 = arith.constant 0 : i32
    %c0_i32_0 = arith.constant 0 : i32
    %c0_i32_1 = arith.constant 0 : i32
    return %c0_i32, %c0_i32_0 : i32, i32
  }
  func.func @transform_6(%arg0: i32) -> (i32, i32) {
    %c0_i32 = arith.constant 0 : i32
    %c0_i32_0 = arith.constant 0 : i32
    %c0_i32_1 = arith.constant 0 : i32
    return %c0_i32, %c0_i32_0 : i32, i32
  }
  func.func @transform_7(%arg0: i32) -> (i32, i32) {
    %c0_i32 = arith.constant 0 : i32
    %c0_i32_0 = arith.constant 0 : i32
    %c0_i32_1 = arith.constant 0 : i32
    return %c0_i32, %c0_i32_0 : i32, i32
  }
  func.func @transform_8(%arg0: i32) -> (i32, i32) {
    %c0_i32 = arith.constant 0 : i32
    %c0_i32_0 = arith.constant 0 : i32
    %c0_i32_1 = arith.constant 0 : i32
    return %c0_i32, %c0_i32_0 : i32, i32
  }
  func.func @transform_9(%arg0: i32) -> (i32, i32) {
    %c0_i32 = arith.constant 0 : i32
    %c0_i32_0 = arith.constant 0 : i32
    %c0_i32_1 = arith.constant 0 : i32
    return %c0_i32, %c0_i32_0 : i32, i32
  }
  func.func @transform_10(%arg0: i32) -> (i32, i32) {
    %c0_i32 = arith.constant 0 : i32
    %c0_i32_0 = arith.constant 0 : i32
    %c0_i32_1 = arith.constant 0 : i32
    return %c0_i32, %c0_i32_0 : i32, i32
  }
  func.func @transform_11(%arg0: i32) -> (i32, i32) {
    %c0_i32 = arith.constant 0 : i32
    %c0_i32_0 = arith.constant 0 : i32
    %c0_i32_1 = arith.constant 0 : i32
    return %c0_i32, %c0_i32_0 : i32, i32
  }
  func.func @transform_12(%arg0: i32) -> (i32, i32) {
    %c0_i32 = arith.constant 0 : i32
    %c0_i32_0 = arith.constant 0 : i32
    %c0_i32_1 = arith.constant 0 : i32
    return %c0_i32, %c0_i32_0 : i32, i32
  }
  func.func @transform_13(%arg0: i32) -> (i32, i32) {
    %c0_i32 = arith.constant 0 : i32
    %c0_i32_0 = arith.constant 0 : i32
    %c0_i32_1 = arith.constant 0 : i32
    return %c0_i32, %c0_i32_0 : i32, i32
  }
  func.func @transform_14(%arg0: i32) -> (i32, i32) {
    %c0_i32 = arith.constant 0 : i32
    %c0_i32_0 = arith.constant 0 : i32
    return %arg0, %c0_i32 : i32, i32
  }
  func.func @transform_15(%arg0: i32) -> (i32, i32) {
    %c0_i32 = arith.constant 0 : i32
    %c0_i32_0 = arith.constant 0 : i32
    return %arg0, %c0_i32 : i32, i32
  }
}

</mosaic_0001>

<llo_original>
// kernel: tpu_custom_call.1
$region0: #{tpu_custom_call.1}
  #allocation0 [shape = 'u32[]', space=smem, size = 0x4, offset = 0x4, fixed_abs, tag = 'smem constant byte address 0x4 - core index']
  #allocation1 [shape = 'u32[144,128]{1,0:T(1,128)}', space=vmem, size = 0x12000, scoped, tag = 'internal scratch']
  %s0 = inlined_call_operand.vmem [shape: f32[2,16,32], index: 0, kind: input, shape index: {}]
  %s1 = inlined_call_operand.vmem [shape: f32[1,32], index: 1, kind: input, shape index: {}]
  %s2 = inlined_call_operand.vmem [shape: f32[1,32], index: 2, kind: input, shape index: {}]
  %s3 = inlined_call_operand.hbm [shape: f32[16,32], index: 3, kind: input, shape index: {}]
  %s4 = inlined_call_operand.vmem [shape: f32[1,32], index: 4, kind: input, shape index: {}]
  %s5 = inlined_call_operand.hbm [shape: f32[16,32], index: 5, kind: input, shape index: {}]
  %s6 = inlined_call_operand.vmem [shape: f32[32,4], index: 6, kind: input, shape index: {}]
  %s7 = inlined_call_operand.vmem [shape: f32[4,32], index: 7, kind: input, shape index: {}]
  %s8 = inlined_call_operand.hbm [shape: f32[32,32], index: 8, kind: input, shape index: {}]
  %s9 = inlined_call_operand.hbm [shape: f32[32,32], index: 9, kind: input, shape index: {}]
  %s10 = inlined_call_operand.hbm [shape: f32[32,32], index: 10, kind: input, shape index: {}]
  %s11 = inlined_call_operand.hbm [shape: f32[32,128], index: 11, kind: input, shape index: {}]
  %s12 = inlined_call_operand.vmem [shape: f32[1,128], index: 12, kind: input, shape index: {}]
  %s13 = inlined_call_operand.vmem [shape: f32[1,128], index: 13, kind: input, shape index: {}]
  %s14 = inlined_call_operand.hbm [shape: f32[2,128], index: 14, kind: output, shape index: {0}]
  %s15 = inlined_call_operand.hbm [shape: f32[32,128], index: 15, kind: output, shape index: {1}]
  %16 = xla_tuple %s14, %s15
  %s17 = sld [smem:[#allocation0]]
  $region98: #{tpu_custom_call.1} parent=0
    _
  %s19 = ssub.s32 1, %s17
  %s20 = scalar_select 0, %s19, %s17
  $region1: #{tpu_custom_call.1} parent=0
    #allocation2 [shape = 'u8[8192]{0}', space=vmem, size = 0x2000, scoped, tag = 'input window, operand 3, single buffered']
    #allocation3 [shape = 's32[1]{0}', space=sflag, size = 0x4, scoped, tag = 'scoped memory for tpu_custom_call.1']
    #allocation4 [shape = 's32[1]{0}', space=sflag, size = 0x4, scoped, tag = 'scoped memory for tpu_custom_call.1']
    #allocation5 [shape = 'u8[8192]{0}', space=vmem, size = 0x2000, scoped, tag = 'input window, operand 5, single buffered']
    #allocation6 [shape = 's32[1]{0}', space=sflag, size = 0x4, scoped, tag = 'scoped memory for tpu_custom_call.1']
    #allocation7 [shape = 'u8[16384]{0}', space=vmem, size = 0x4000, scoped, tag = 'input window, operand 8, single buffered']
    #allocation8 [shape = 'u8[16384]{0}', space=vmem, size = 0x4000, scoped, tag = 'input window, operand 9, single buffered']
    #allocation9 [shape = 's32[1]{0}', space=sflag, size = 0x4, scoped, tag = 'scoped memory for tpu_custom_call.1']
    #allocation10 [shape = 'u8[16384]{0}', space=vmem, size = 0x4000, scoped, tag = 'input window, operand 10, single buffered']
    #allocation11 [shape = 'u8[16384]{0}', space=vmem, size = 0x4000, scoped, tag = 'input window, operand 11, single buffered']
    #allocation12 [shape = 's32[1]{0}', space=sflag, size = 0x4, scoped, tag = 'scoped memory for tpu_custom_call.1']
    #allocation13 [shape = 'u8[1024]{0}', space=vmem, size = 0x400, scoped, tag = 'output window, operand 0, single buffered']
    #allocation14 [shape = 'u8[16384]{0}', space=vmem, size = 0x4000, scoped, tag = 'output window, operand 1, single buffered']
    #allocation15 [shape = 's32[1]{0}', space=sflag, size = 0x4, scoped, tag = 'scoped memory for tpu_custom_call.1']
    %21 = vsyncpa [#allocation3], 0
    %22 = vsyncpa [#allocation6], 0
    %23 = vsyncpa [#allocation9], 0
    %24 = vsyncpa [#allocation12], 0
    %25 = vsyncpa [#allocation4], 0
    %26 = vsyncpa [#allocation15], 0
    // Predicated region
    $region2: #{tpu_custom_call.1} parent=1 // pred_check
      _
    $region3: #{tpu_custom_call.1} parent=1 // pred_check_branch
      %28 = sbr.rel (0) target = $region5
    $region4: #{tpu_custom_call.1} parent=1 // pred_region
      _
    $region5: #{tpu_custom_call.1} parent=1 // pred_fallthru
      _
    // Predicated region
    $region6: #{tpu_custom_call.1} parent=1 // pred_check
      _
    $region7: #{tpu_custom_call.1} parent=1 // pred_check_branch
      %30 = sbr.rel (0) target = $region9
    $region8: #{tpu_custom_call.1} parent=1 // pred_region
      _
    $region9: #{tpu_custom_call.1} parent=1 // pred_fallthru
      _
    // Predicated region
    $region10: #{tpu_custom_call.1} parent=1 // pred_check
      _
    $region11: #{tpu_custom_call.1} parent=1 // pred_check_branch
      %32 = sbr.rel (0) target = $region13
    $region12: #{tpu_custom_call.1} parent=1 // pred_region
      _
    $region13: #{tpu_custom_call.1} parent=1 // pred_fallthru
      _
    // Predicated region
    $region14: #{tpu_custom_call.1} parent=1 // pred_check
      _
    $region15: #{tpu_custom_call.1} parent=1 // pred_check_branch
      %34 = sbr.rel (0) target = $region17
    $region16: #{tpu_custom_call.1} parent=1 // pred_region
      %s36 = ssub.s32 256, 256
      %37 = vsyncadd [#allocation3], %s36
      %s38 = sshll.u32 [#allocation2], 4
      %s39 = int_to_ptr.vmem [resolvable:$true] %s38
      %44 = dma.hbm_to_vmem [thread:$0]  %s3, 256, %s39, [#allocation3], 128, 128, 8
    $region17: #{tpu_custom_call.1} parent=1 // pred_fallthru
      _
    // Predicated region
    $region18: #{tpu_custom_call.1} parent=1 // pred_check
      _
    $region19: #{tpu_custom_call.1} parent=1 // pred_check_branch
      %46 = sbr.rel (0) target = $region21
    $region20: #{tpu_custom_call.1} parent=1 // pred_region
      _
    $region21: #{tpu_custom_call.1} parent=1 // pred_fallthru
      _
    // Predicated region
    $region22: #{tpu_custom_call.1} parent=1 // pred_check
      _
    $region23: #{tpu_custom_call.1} parent=1 // pred_check_branch
      %48 = sbr.rel (0) target = $region25
    $region24: #{tpu_custom_call.1} parent=1 // pred_region
      %s50 = ssub.s32 256, 256
      %51 = vsyncadd [#allocation6], %s50
      %s52 = sshll.u32 [#allocation5], 4
      %s53 = int_to_ptr.vmem [resolvable:$true] %s52
      %58 = dma.hbm_to_vmem [thread:$0]  %s5, 256, %s53, [#allocation6], 128, 128, 8
    $region25: #{tpu_custom_call.1} parent=1 // pred_fallthru
      _
    // Predicated region
    $region26: #{tpu_custom_call.1} parent=1 // pred_check
      _
    $region27: #{tpu_custom_call.1} parent=1 // pred_check_branch
      %60 = sbr.rel (0) target = $region29
    $region28: #{tpu_custom_call.1} parent=1 // pred_region
      _
    $region29: #{tpu_custom_call.1} parent=1 // pred_fallthru
      _
    // Predicated region
    $region30: #{tpu_custom_call.1} parent=1 // pred_check
      _
    $region31: #{tpu_custom_call.1} parent=1 // pred_check_branch
      %62 = sbr.rel (0) target = $region33
    $region32: #{tpu_custom_call.1} parent=1 // pred_region
      _
    $region33: #{tpu_custom_call.1} parent=1 // pred_fallthru
      _
    // Predicated region
    $region34: #{tpu_custom_call.1} parent=1 // pred_check
      _
    $region35: #{tpu_custom_call.1} parent=1 // pred_check_branch
      %64 = sbr.rel (0) target = $region37
    $region36: #{tpu_custom_call.1} parent=1 // pred_region
      %s66 = ssub.s32 512, 512
      %67 = vsyncadd [#allocation6], %s66
      %s68 = sshll.u32 [#allocation7], 4
      %s69 = int_to_ptr.vmem [resolvable:$true] %s68
      %74 = dma.hbm_to_vmem [thread:$0]  %s8, 512, %s69, [#allocation6], 128, 128, 8
    $region37: #{tpu_custom_call.1} parent=1 // pred_fallthru
      _
    // Predicated region
    $region38: #{tpu_custom_call.1} parent=1 // pred_check
      _
    $region39: #{tpu_custom_call.1} parent=1 // pred_check_branch
      %76 = sbr.rel (0) target = $region41
    $region40: #{tpu_custom_call.1} parent=1 // pred_region
      %s78 = ssub.s32 512, 512
      %79 = vsyncadd [#allocation9], %s78
      %s80 = sshll.u32 [#allocation8], 4
      %s81 = int_to_ptr.vmem [resolvable:$true] %s80
      %86 = dma.hbm_to_vmem [thread:$0]  %s9, 512, %s81, [#allocation9], 128, 128, 8
    $region41: #{tpu_custom_call.1} parent=1 // pred_fallthru
      _
    // Predicated region
    $region42: #{tpu_custom_call.1} parent=1 // pred_check
      _
    $region43: #{tpu_custom_call.1} parent=1 // pred_check_branch
      %88 = sbr.rel (0) target = $region45
    $region44: #{tpu_custom_call.1} parent=1 // pred_region
      %s90 = ssub.s32 512, 512
      %91 = vsyncadd [#allocation9], %s90
      %s92 = sshll.u32 [#allocation10], 4
      %s93 = int_to_ptr.vmem [resolvable:$true] %s92
      %98 = dma.hbm_to_vmem [thread:$0]  %s10, 512, %s93, [#allocation9], 128, 128, 8
    $region45: #{tpu_custom_call.1} parent=1 // pred_fallthru
      _
    // Predicated region
    $region46: #{tpu_custom_call.1} parent=1 // pred_check
      _
    $region47: #{tpu_custom_call.1} parent=1 // pred_check_branch
      %100 = sbr.rel (0) target = $region49
    $region48: #{tpu_custom_call.1} parent=1 // pred_region
      %s102 = ssub.s32 512, 512
      %103 = vsyncadd [#allocation12], %s102
      %s104 = sshll.u32 [#allocation11], 4
      %s105 = int_to_ptr.vmem [resolvable:$true] %s104
      %110 = dma.hbm_to_vmem [thread:$0]  %s11, 512, %s105, [#allocation12], 128, 128, 8
    $region49: #{tpu_custom_call.1} parent=1 // pred_fallthru
      _
    // Predicated region
    $region50: #{tpu_custom_call.1} parent=1 // pred_check
      _
    $region51: #{tpu_custom_call.1} parent=1 // pred_check_branch
      %112 = sbr.rel (0) target = $region53
    $region52: #{tpu_custom_call.1} parent=1 // pred_region
      _
    $region53: #{tpu_custom_call.1} parent=1 // pred_fallthru
      _
    // Predicated region
    $region54: #{tpu_custom_call.1} parent=1 // pred_check
      _
    $region55: #{tpu_custom_call.1} parent=1 // pred_check_branch
      %114 = sbr.rel (0) target = $region57
    $region56: #{tpu_custom_call.1} parent=1 // pred_region
      _
    $region57: #{tpu_custom_call.1} parent=1 // pred_fallthru
      _
    // Predicated region
    $region58: #{tpu_custom_call.1} parent=1 // pred_check
      _
    $region59: #{tpu_custom_call.1} parent=1 // pred_check_branch
      %116 = sbr.rel (0) target = $region61
    $region60: #{tpu_custom_call.1} parent=1 // pred_region
      %117 = dma.done [#allocation3], 256
    $region61: #{tpu_custom_call.1} parent=1 // pred_fallthru
      _
    // Predicated region
    $region62: #{tpu_custom_call.1} parent=1 // pred_check
      _
    $region63: #{tpu_custom_call.1} parent=1 // pred_check_branch
      %119 = sbr.rel (0) target = $region65
    $region64: #{tpu_custom_call.1} parent=1 // pred_region
      %120 = dma.done [#allocation6], 256
    $region65: #{tpu_custom_call.1} parent=1 // pred_fallthru
      _
    // Predicated region
    $region66: #{tpu_custom_call.1} parent=1 // pred_check
      _
    $region67: #{tpu_custom_call.1} parent=1 // pred_check_branch
      %122 = sbr.rel (0) target = $region69
    $region68: #{tpu_custom_call.1} parent=1 // pred_region
      %123 = dma.done [#allocation6], 512
    $region69: #{tpu_custom_call.1} parent=1 // pred_fallthru
      _
    // Predicated region
    $region70: #{tpu_custom_call.1} parent=1 // pred_check
      _
    $region71: #{tpu_custom_call.1} parent=1 // pred_check_branch
      %125 = sbr.rel (0) target = $region73
    $region72: #{tpu_custom_call.1} parent=1 // pred_region
      %126 = dma.done [#allocation9], 512
    $region73: #{tpu_custom_call.1} parent=1 // pred_fallthru
      _
    // Predicated region
    $region74: #{tpu_custom_call.1} parent=1 // pred_check
      _
    $region75: #{tpu_custom_call.1} parent=1 // pred_check_branch
      %128 = sbr.rel (0) target = $region77
    $region76: #{tpu_custom_call.1} parent=1 // pred_region
      %129 = dma.done [#allocation9], 512
    $region77: #{tpu_custom_call.1} parent=1 // pred_fallthru
      _
    // Predicated region
    $region78: #{tpu_custom_call.1} parent=1 // pred_check
      _
    $region79: #{tpu_custom_call.1} parent=1 // pred_check_branch
      %131 = sbr.rel (0) target = $region81
    $region80: #{tpu_custom_call.1} parent=1 // pred_region
      %132 = dma.done [#allocation12], 512
    $region81: #{tpu_custom_call.1} parent=1 // pred_fallthru
      _
    %v133 = vld [vmem:[%s0] sm:$0xff]
    %v134 = vld [vmem:[%s0 + $0x8] sm:$0xff]
    %v135 = vld [vmem:[%s0 + $0x10] sm:$0xff]
    %v136 = vld [vmem:[%s0 + $0x18] sm:$0xff]
    %v137 = vld [vmem:[#allocation10] sm:$0xff]
    %v138 = vld [vmem:[#allocation10 + $0x8] sm:$0xff]
    %v139 = vld [vmem:[#allocation10 + $0x10] sm:$0xff]
    %v140 = vld [vmem:[#allocation10 + $0x18] sm:$0xff]
    %v141 = vld [vmem:[#allocation8] sm:$0xff]
    %v142 = vld [vmem:[#allocation8 + $0x8] sm:$0xff]
    %v143 = vld [vmem:[#allocation8 + $0x10] sm:$0xff]
    %v144 = vld [vmem:[#allocation8 + $0x18] sm:$0xff]
    %v145 = vld [vmem:[#allocation11] sm:$0xff]
    %v146 = vld [vmem:[#allocation11 + $0x8] sm:$0xff]
    %v147 = vld [vmem:[#allocation11 + $0x10] sm:$0xff]
    %v148 = vld [vmem:[#allocation11 + $0x18] sm:$0xff]
    %vm149 = vcmask 261120
    %v151 = vsel %vm149, %v133, 0
    %v154 = vsel %vm149, %v134, 0
    %v157 = vsel %vm149, %v135, 0
    %v160 = vsel %vm149, %v136, 0
    %162 = vmatprep.subr.mxu0 0.0
    %163 = vmatpush1.msra.mxu0 0.0
    %164 = vmatprep.subr.mxu0 0.0
    %165 = vmatpush1.msra.mxu0 0.0
    %166 = vmatprep.subr.mxu0 0.0
    %167 = vmatpush1.msra.mxu0 0.0
    %168 = vmatprep.subr.mxu0 0.0
    %169 = vmatpush1.msra.mxu0 0.0
    %170 = vmatprep.subr.mxu0 0.0
    %171 = vmatpush1.msra.mxu0 0.0
    %172 = vmatprep.subr.mxu0 0.0
    %173 = vmatpush1.msra.mxu0 0.0
    %174 = vmatprep.subr.mxu0 0.0
    %175 = vmatpush1.msra.mxu0 0.0
    %176 = vmatprep.subr.mxu0 0.0
    %177 = vmatpush1.msra.mxu0 0.0
    %178 = vmatprep.subr.mxu0 0.0
    %179 = vmatpush1.msra.mxu0 0.0
    %180 = vmatprep.subr.mxu0 0.0
    %181 = vmatpush1.msra.mxu0 0.0
    %182 = vmatprep.subr.mxu0 0.0
    %183 = vmatpush1.msra.mxu0 0.0
    %184 = vmatprep.subr.mxu0 0.0
    %185 = vmatpush1.msra.mxu0 0.0
    %186 = vmatprep.subr.mxu0 0.0
    %187 = vmatpush1.msra.mxu0 %v140
    %188 = vmatprep.subr.mxu0 0.0
    %189 = vmatpush1.msra.mxu0 %v139
    %190 = vmatprep.subr.mxu0 0.0
    %191 = vmatpush1.msra.mxu0 %v138
    %192 = vmatprep.subr.mxu0 0.0
    %193 = vmatpush1.msra.mxu0 %v137
    %194 = vmatprep.subr.mxu0 0.0
    %195 = vmatpush2.msra.mxu0 0.0
    %196 = vmatprep.subr.mxu0 0.0
    %197 = vmatpush2.msra.mxu0 0.0
    %198 = vmatprep.subr.mxu0 0.0
    %199 = vmatpush2.msra.mxu0 0.0
    %200 = vmatprep.subr.mxu0 0.0
    %201 = vmatpush2.msra.mxu0 0.0
    %202 = vmatprep.subr.mxu0 0.0
    %203 = vmatpush2.msra.mxu0 0.0
    %204 = vmatprep.subr.mxu0 0.0
    %205 = vmatpush2.msra.mxu0 0.0
    %206 = vmatprep.subr.mxu0 0.0
    %207 = vmatpush2.msra.mxu0 0.0
    %208 = vmatprep.subr.mxu0 0.0
    %209 = vmatpush2.msra.mxu0 0.0
    %210 = vmatprep.subr.mxu0 0.0
    %211 = vmatpush2.msra.mxu0 0.0
    %212 = vmatprep.subr.mxu0 0.0
    %213 = vmatpush2.msra.mxu0 0.0
    %214 = vmatprep.subr.mxu0 0.0
    %215 = vmatpush2.msra.mxu0 0.0
    %216 = vmatprep.subr.mxu0 0.0
    %217 = vmatpush2.msra.mxu0 0.0
    %218 = vmatprep.subr.mxu0 0.0
    %219 = vmatpush2.msra.mxu0 0.0
    %220 = vmatprep.subr.mxu0 0.0
    %221 = vmatpush2.msra.mxu0 0.0
    %222 = vmatprep.subr.mxu0 0.0
    %223 = vmatpush2.msra.mxu0 0.0
    %224 = vmatprep.subr.mxu0 0.0
    %225 = vmatpush2.msra.mxu0 0.0
    %226 = vmatprep.mubr.f32.mxu0 0.0
    %227 = vmatmul.mubr.f32.gmra.mxu0 %v151
    %v228 = vpop.f32.mrf.mxu0
    %v229 = vadd.f32 0.0, %v228
    %v230 = vpop.f32.mrf.mxu0
    %231 = vmatprep.mubr.f32.mxu0 0.0
    %232 = vmatmul.mubr.f32.gmra.mxu0 %v154
    %v233 = vpop.f32.mrf.mxu0
    %v234 = vadd.f32 0.0, %v233
    %v235 = vpop.f32.mrf.mxu0
    %236 = vmatprep.mubr.f32.mxu0 0.0
    %237 = vmatmul.mubr.f32.gmra.mxu0 %v157
    %v238 = vpop.f32.mrf.mxu0
    %v239 = vadd.f32 0.0, %v238
    %v240 = vpop.f32.mrf.mxu0
    %241 = vmatprep.mubr.f32.mxu0 0.0
    %242 = vmatmul.mubr.f32.gmra.mxu0 %v160
    %v243 = vpop.f32.mrf.mxu0
    %v244 = vadd.f32 0.0, %v243
    %v245 = vpop.f32.mrf.mxu0
    %246 = vdwg.mxu0
    %247 = vmatprep.subr.mxu0 0.0
    %248 = vmatpush1.msra.mxu0 0.0
    %249 = vmatprep.subr.mxu0 0.0
    %250 = vmatpush1.msra.mxu0 0.0
    %251 = vmatprep.subr.mxu0 0.0
    %252 = vmatpush1.msra.mxu0 0.0
    %253 = vmatprep.subr.mxu0 0.0
    %254 = vmatpush1.msra.mxu0 0.0
    %255 = vmatprep.subr.mxu0 0.0
    %256 = vmatpush1.msra.mxu0 0.0
    %257 = vmatprep.subr.mxu0 0.0
    %258 = vmatpush1.msra.mxu0 0.0
    %259 = vmatprep.subr.mxu0 0.0
    %260 = vmatpush1.msra.mxu0 0.0
    %261 = vmatprep.subr.mxu0 0.0
    %262 = vmatpush1.msra.mxu0 0.0
    %263 = vmatprep.subr.mxu0 0.0
    %264 = vmatpush1.msra.mxu0 0.0
    %265 = vmatprep.subr.mxu0 0.0
    %266 = vmatpush1.msra.mxu0 0.0
    %267 = vmatprep.subr.mxu0 0.0
    %268 = vmatpush1.msra.mxu0 0.0
    %269 = vmatprep.subr.mxu0 0.0
    %270 = vmatpush1.msra.mxu0 0.0
    %271 = vmatprep.subr.mxu0 0.0
    %272 = vmatpush1.msra.mxu0 %v144
    %273 = vmatprep.subr.mxu0 0.0
    %274 = vmatpush1.msra.mxu0 %v143
    %275 = vmatprep.subr.mxu0 0.0
    %276 = vmatpush1.msra.mxu0 %v142
    %277 = vmatprep.subr.mxu0 0.0
    %278 = vmatpush1.msra.mxu0 %v141
    %279 = vmatprep.subr.mxu0 0.0
    %280 = vmatpush2.msra.mxu0 0.0
    %281 = vmatprep.subr.mxu0 0.0
    %282 = vmatpush2.msra.mxu0 0.0
    %283 = vmatprep.subr.mxu0 0.0
    %284 = vmatpush2.msra.mxu0 0.0
    %285 = vmatprep.subr.mxu0 0.0
    %286 = vmatpush2.msra.mxu0 0.0
    %287 = vmatprep.subr.mxu0 0.0
    %288 = vmatpush2.msra.mxu0 0.0
    %289 = vmatprep.subr.mxu0 0.0
    %290 = vmatpush2.msra.mxu0 0.0
    %291 = vmatprep.subr.mxu0 0.0
    %292 = vmatpush2.msra.mxu0 0.0
    %293 = vmatprep.subr.mxu0 0.0
    %294 = vmatpush2.msra.mxu0 0.0
    %295 = vmatprep.subr.mxu0 0.0
    %296 = vmatpush2.msra.mxu0 0.0
    %297 = vmatprep.subr.mxu0 0.0
    %298 = vmatpush2.msra.mxu0 0.0
    %299 = vmatprep.subr.mxu0 0.0
    %300 = vmatpush2.msra.mxu0 0.0
    %301 = vmatprep.subr.mxu0 0.0
    %302 = vmatpush2.msra.mxu0 0.0
    %303 = vmatprep.subr.mxu0 0.0
    %304 = vmatpush2.msra.mxu0 0.0
    %305 = vmatprep.subr.mxu0 0.0
    %306 = vmatpush2.msra.mxu0 0.0
    %307 = vmatprep.subr.mxu0 0.0
    %308 = vmatpush2.msra.mxu0 0.0
    %309 = vmatprep.subr.mxu0 0.0
    %310 = vmatpush2.msra.mxu0 0.0
    %311 = vmatprep.mubr.f32.mxu0 0.0
    %312 = vmatmul.mubr.f32.gmra.mxu0 %v151
    %v313 = vpop.f32.mrf.mxu0
    %v314 = vadd.f32 0.0, %v313
    %v315 = vpop.f32.mrf.mxu0
    %316 = vmatprep.mubr.f32.mxu0 0.0
    %317 = vmatmul.mubr.f32.gmra.mxu0 %v154
    %v318 = vpop.f32.mrf.mxu0
    %v319 = vadd.f32 0.0, %v318
    %v320 = vpop.f32.mrf.mxu0
    %321 = vmatprep.mubr.f32.mxu0 0.0
    %322 = vmatmul.mubr.f32.gmra.mxu0 %v157
    %v323 = vpop.f32.mrf.mxu0
    %v324 = vadd.f32 0.0, %v323
    %v325 = vpop.f32.mrf.mxu0
    %326 = vmatprep.mubr.f32.mxu0 0.0
    %327 = vmatmul.mubr.f32.gmra.mxu0 %v160
    %v328 = vpop.f32.mrf.mxu0
    %v329 = vadd.f32 0.0, %v328
    %v330 = vpop.f32.mrf.mxu0
    %331 = vdwg.mxu0
    %v332 = vld [vmem:[%s12] sm:$0x1]
    %v334 = vlaneseq
    %v335 = vshrl.u32 %v334, 7
    %v336 = vsub.s32 0, %v335
    %v337 = vrot.slane %v332, %v336
    %v340 = vsel %vm149, %v229, 0
    %v343 = vsel %vm149, %v234, 0
    %v346 = vsel %vm149, %v239, 0
    %v349 = vsel %vm149, %v244, 0
    %351 = vmatprep.subr.mxu0 0.0
    %352 = vmatpush1.msra.mxu0 0.0
    %353 = vmatprep.subr.mxu0 0.0
    %354 = vmatpush1.msra.mxu0 0.0
    %355 = vmatprep.subr.mxu0 0.0
    %356 = vmatpush1.msra.mxu0 0.0
    %357 = vmatprep.subr.mxu0 0.0
    %358 = vmatpush1.msra.mxu0 0.0
    %359 = vmatprep.subr.mxu0 0.0
    %360 = vmatpush1.msra.mxu0 0.0
    %361 = vmatprep.subr.mxu0 0.0
    %362 = vmatpush1.msra.mxu0 0.0
    %363 = vmatprep.subr.mxu0 0.0
    %364 = vmatpush1.msra.mxu0 0.0
    %365 = vmatprep.subr.mxu0 0.0
    %366 = vmatpush1.msra.mxu0 0.0
    %367 = vmatprep.subr.mxu0 0.0
    %368 = vmatpush1.msra.mxu0 0.0
    %369 = vmatprep.subr.mxu0 0.0
    %370 = vmatpush1.msra.mxu0 0.0
    %371 = vmatprep.subr.mxu0 0.0
    %372 = vmatpush1.msra.mxu0 0.0
    %373 = vmatprep.subr.mxu0 0.0
    %374 = vmatpush1.msra.mxu0 0.0
    %375 = vmatprep.subr.mxu0 0.0
    %376 = vmatpush1.msra.mxu0 %v148
    %377 = vmatprep.subr.mxu0 0.0
    %378 = vmatpush1.msra.mxu0 %v147
    %379 = vmatprep.subr.mxu0 0.0
    %380 = vmatpush1.msra.mxu0 %v146
    %381 = vmatprep.subr.mxu0 0.0
    %382 = vmatpush1.msra.mxu0 %v145
    %383 = vmatprep.subr.mxu0 0.0
    %384 = vmatpush2.msra.mxu0 0.0
    %385 = vmatprep.subr.mxu0 0.0
    %386 = vmatpush2.msra.mxu0 0.0
    %387 = vmatprep.subr.mxu0 0.0
    %388 = vmatpush2.msra.mxu0 0.0
    %389 = vmatprep.subr.mxu0 0.0
    %390 = vmatpush2.msra.mxu0 0.0
    %391 = vmatprep.subr.mxu0 0.0
    %392 = vmatpush2.msra.mxu0 0.0
    %393 = vmatprep.subr.mxu0 0.0
    %394 = vmatpush2.msra.mxu0 0.0
    %395 = vmatprep.subr.mxu0 0.0
    %396 = vmatpush2.msra.mxu0 0.0
    %397 = vmatprep.subr.mxu0 0.0
    %398 = vmatpush2.msra.mxu0 0.0
    %399 = vmatprep.subr.mxu0 0.0
    %400 = vmatpush2.msra.mxu0 0.0
    %401 = vmatprep.subr.mxu0 0.0
    %402 = vmatpush2.msra.mxu0 0.0
    %403 = vmatprep.subr.mxu0 0.0
    %404 = vmatpush2.msra.mxu0 0.0
    %405 = vmatprep.subr.mxu0 0.0
    %406 = vmatpush2.msra.mxu0 0.0
    %407 = vmatprep.subr.mxu0 0.0
    %408 = vmatpush2.msra.mxu0 0.0
    %409 = vmatprep.subr.mxu0 0.0
    %410 = vmatpush2.msra.mxu0 0.0
    %411 = vmatprep.subr.mxu0 0.0
    %412 = vmatpush2.msra.mxu0 0.0
    %413 = vmatprep.subr.mxu0 0.0
    %414 = vmatpush2.msra.mxu0 0.0
    %415 = vmatprep.mubr.f32.mxu0 0.0
    %416 = vmatmul.mubr.f32.gmra.mxu0 %v340
    %v417 = vpop.f32.mrf.mxu0
    %v418 = vadd.f32 %v337, %v417
    %v419 = vpop.f32.mrf.mxu0
    %420 = vmatprep.mubr.f32.mxu0 0.0
    %421 = vmatmul.mubr.f32.gmra.mxu0 %v343
    %v422 = vpop.f32.mrf.mxu0
    %v423 = vadd.f32 %v337, %v422
    %v424 = vpop.f32.mrf.mxu0
    %425 = vmatprep.mubr.f32.mxu0 0.0
    %426 = vmatmul.mubr.f32.gmra.mxu0 %v346
    %v427 = vpop.f32.mrf.mxu0
    %v428 = vadd.f32 %v337, %v427
    %v429 = vpop.f32.mrf.mxu0
    %430 = vmatprep.mubr.f32.mxu0 0.0
    %431 = vmatmul.mubr.f32.gmra.mxu0 %v349
    %v432 = vpop.f32.mrf.mxu0
    %v433 = vadd.f32 %v337, %v432
    %v434 = vpop.f32.mrf.mxu0
    %435 = vdwg.mxu0
    %436 = vst [vmem:[#allocation14] sm:$0xff] %v418
    %437 = vst [vmem:[#allocation14 + $0x8] sm:$0xff] %v423
    %438 = vst [vmem:[#allocation14 + $0x10] sm:$0xff] %v428
    %439 = vst [vmem:[#allocation14 + $0x18] sm:$0xff] %v433
    %v440 = vsel %vm149, %v314, 0.0
    %v441 = vsel %vm149, %v319, 0.0
    %v442 = vadd.f32 %v440, %v441
    %v443 = vrot.slane %v442, 4
    %v444 = vadd.f32 %v442, %v443
    %v445 = vrot.slane %v444, 2
    %v446 = vadd.f32 %v444, %v445
    %v447 = vrot.slane %v446, 1
    %v448 = vadd.f32 %v446, %v447
    %v449 = vsel %vm149, %v324, 0.0
    %v450 = vsel %vm149, %v329, 0.0
    %v451 = vadd.f32 %v449, %v450
    %v452 = vrot.slane %v451, 4
    %v453 = vadd.f32 %v451, %v452
    %v454 = vrot.slane %v453, 2
    %v455 = vadd.f32 %v453, %v454
    %v456 = vrot.slane %v455, 1
    %v457 = vadd.f32 %v455, %v456
    %v458 = vmul.f32 %v448, 0.0625
    %v459 = vmul.f32 %v457, 0.0625
    %v460 = vld [vmem:[%s2] sm:$0x1]
    %v462 = vlaneseq
    %v463 = vshrl.u32 %v462, 7
    %v464 = vsub.s32 0, %v463
    %v465 = vrot.slane %v460, %v464
    %v467 = vadd.f32 %v458, %v465
    %v468 = vadd.f32 %v459, %v465
    %v469 = vsel %vm149, %v229, 0.0
    %v470 = vsel %vm149, %v234, 0.0
    %v471 = vadd.f32 %v469, %v470
    %v472 = vrot.slane %v471, 4
    %v473 = vadd.f32 %v471, %v472
    %v474 = vrot.slane %v473, 2
    %v475 = vadd.f32 %v473, %v474
    %v476 = vrot.slane %v475, 1
    %v477 = vadd.f32 %v475, %v476
    %v478 = vsel %vm149, %v239, 0.0
    %v479 = vsel %vm149, %v244, 0.0
    %v480 = vadd.f32 %v478, %v479
    %v481 = vrot.slane %v480, 4
    %v482 = vadd.f32 %v480, %v481
    %v483 = vrot.slane %v482, 2
    %v484 = vadd.f32 %v482, %v483
    %v485 = vrot.slane %v484, 1
    %v486 = vadd.f32 %v484, %v485
    %v487 = vmul.f32 %v477, 0.0625
    %v488 = vmul.f32 %v486, 0.0625
    %v489 = vld [vmem:[%s4] sm:$0x1]
    %v491 = vlaneseq
    %v492 = vshrl.u32 %v491, 7
    %v493 = vsub.s32 0, %v492
    %v494 = vrot.slane %v489, %v493
    %v496 = vadd.f32 %v487, %v494
    %v497 = vadd.f32 %v488, %v494
    %v498 = vsel %vm149, %v133, 0.0
    %v499 = vsel %vm149, %v134, 0.0
    %v500 = vadd.f32 %v498, %v499
    %v501 = vrot.slane %v500, 4
    %v502 = vadd.f32 %v500, %v501
    %v503 = vrot.slane %v502, 2
    %v504 = vadd.f32 %v502, %v503
    %v505 = vrot.slane %v504, 1
    %v506 = vadd.f32 %v504, %v505
    %v507 = vsel %vm149, %v135, 0.0
    %v508 = vsel %vm149, %v136, 0.0
    %v509 = vadd.f32 %v507, %v508
    %v510 = vrot.slane %v509, 4
    %v511 = vadd.f32 %v509, %v510
    %v512 = vrot.slane %v511, 2
    %v513 = vadd.f32 %v511, %v512
    %v514 = vrot.slane %v513, 1
    %v515 = vadd.f32 %v513, %v514
    %v516 = vmul.f32 %v506, 0.0625
    %v517 = vmul.f32 %v515, 0.0625
    %v518 = vld [vmem:[#allocation7] sm:$0xff]
    %v519 = vld [vmem:[#allocation7 + $0x8] sm:$0xff]
    %v520 = vld [vmem:[#allocation7 + $0x10] sm:$0xff]
    %v521 = vld [vmem:[#allocation7 + $0x18] sm:$0xff]
    %v522 = vld [vmem:[%s1] sm:$0x1]
    %v524 = vlaneseq
    %v525 = vshrl.u32 %v524, 7
    %v526 = vsub.s32 0, %v525
    %v527 = vrot.slane %v522, %v526
    %vm531 = vcmask 1041409
    %v532 = vsel %vm531, %v517, %v516
    %v533 = vsel %vm149, %v532, 0
    %535 = vmatprep.subr.mxu0 0.0
    %536 = vmatpush1.msra.mxu0 0.0
    %537 = vmatprep.subr.mxu0 0.0
    %538 = vmatpush1.msra.mxu0 0.0
    %539 = vmatprep.subr.mxu0 0.0
    %540 = vmatpush1.msra.mxu0 0.0
    %541 = vmatprep.subr.mxu0 0.0
    %542 = vmatpush1.msra.mxu0 0.0
    %543 = vmatprep.subr.mxu0 0.0
    %544 = vmatpush1.msra.mxu0 0.0
    %545 = vmatprep.subr.mxu0 0.0
    %546 = vmatpush1.msra.mxu0 0.0
    %547 = vmatprep.subr.mxu0 0.0
    %548 = vmatpush1.msra.mxu0 0.0
    %549 = vmatprep.subr.mxu0 0.0
    %550 = vmatpush1.msra.mxu0 0.0
    %551 = vmatprep.subr.mxu0 0.0
    %552 = vmatpush1.msra.mxu0 0.0
    %553 = vmatprep.subr.mxu0 0.0
    %554 = vmatpush1.msra.mxu0 0.0
    %555 = vmatprep.subr.mxu0 0.0
    %556 = vmatpush1.msra.mxu0 0.0
    %557 = vmatprep.subr.mxu0 0.0
    %558 = vmatpush1.msra.mxu0 0.0
    %559 = vmatprep.subr.mxu0 0.0
    %560 = vmatpush1.msra.mxu0 %v521
    %561 = vmatprep.subr.mxu0 0.0
    %562 = vmatpush1.msra.mxu0 %v520
    %563 = vmatprep.subr.mxu0 0.0
    %564 = vmatpush1.msra.mxu0 %v519
    %565 = vmatprep.subr.mxu0 0.0
    %566 = vmatpush1.msra.mxu0 %v518
    %567 = vmatprep.subr.mxu0 0.0
    %568 = vmatpush2.msra.mxu0 0.0
    %569 = vmatprep.subr.mxu0 0.0
    %570 = vmatpush2.msra.mxu0 0.0
    %571 = vmatprep.subr.mxu0 0.0
    %572 = vmatpush2.msra.mxu0 0.0
    %573 = vmatprep.subr.mxu0 0.0
    %574 = vmatpush2.msra.mxu0 0.0
    %575 = vmatprep.subr.mxu0 0.0
    %576 = vmatpush2.msra.mxu0 0.0
    %577 = vmatprep.subr.mxu0 0.0
    %578 = vmatpush2.msra.mxu0 0.0
    %579 = vmatprep.subr.mxu0 0.0
    %580 = vmatpush2.msra.mxu0 0.0
    %581 = vmatprep.subr.mxu0 0.0
    %582 = vmatpush2.msra.mxu0 0.0
    %583 = vmatprep.subr.mxu0 0.0
    %584 = vmatpush2.msra.mxu0 0.0
    %585 = vmatprep.subr.mxu0 0.0
    %586 = vmatpush2.msra.mxu0 0.0
    %587 = vmatprep.subr.mxu0 0.0
    %588 = vmatpush2.msra.mxu0 0.0
    %589 = vmatprep.subr.mxu0 0.0
    %590 = vmatpush2.msra.mxu0 0.0
    %591 = vmatprep.subr.mxu0 0.0
    %592 = vmatpush2.msra.mxu0 0.0
    %593 = vmatprep.subr.mxu0 0.0
    %594 = vmatpush2.msra.mxu0 0.0
    %595 = vmatprep.subr.mxu0 0.0
    %596 = vmatpush2.msra.mxu0 0.0
    %597 = vmatprep.subr.mxu0 0.0
    %598 = vmatpush2.msra.mxu0 0.0
    %599 = vmatprep.mubr.f32.mxu0 0.0
    %600 = vmatmul.mubr.f32.gmra.mxu0 %v533
    %v601 = vpop.f32.mrf.mxu0
    %v602 = vadd.f32 %v527, %v601
    %v603 = vpop.f32.mrf.mxu0
    %604 = vdwg.mxu0
    %v605 = vld [vmem:[%s6] sm:$0xff]
    %v606 = vld [vmem:[%s6 + $0x8] sm:$0xff]
    %v607 = vld [vmem:[%s6 + $0x10] sm:$0xff]
    %v608 = vld [vmem:[%s6 + $0x18] sm:$0xff]
    %v609 = vld [vmem:[%s7] sm:$0xf]
    %v612 = vrot.slane %v468, 7
    %v613 = vsel %vm531, %v612, %v467
    %v615 = vmul.f32 %v602, %v613
    %v617 = vsel %vm149, %v615, 0
    %619 = vmatprep.subr.mxu0 0.0
    %620 = vmatpush1.msra.mxu0 0.0
    %621 = vmatprep.subr.mxu0 0.0
    %622 = vmatpush1.msra.mxu0 0.0
    %623 = vmatprep.subr.mxu0 0.0
    %624 = vmatpush1.msra.mxu0 0.0
    %625 = vmatprep.subr.mxu0 0.0
    %626 = vmatpush1.msra.mxu0 0.0
    %627 = vmatprep.subr.mxu0 0.0
    %628 = vmatpush1.msra.mxu0 0.0
    %629 = vmatprep.subr.mxu0 0.0
    %630 = vmatpush1.msra.mxu0 0.0
    %631 = vmatprep.subr.mxu0 0.0
    %632 = vmatpush1.msra.mxu0 0.0
    %633 = vmatprep.subr.mxu0 0.0
    %634 = vmatpush1.msra.mxu0 0.0
    %635 = vmatprep.subr.mxu0 0.0
    %636 = vmatpush1.msra.mxu0 0.0
    %637 = vmatprep.subr.mxu0 0.0
    %638 = vmatpush1.msra.mxu0 0.0
    %639 = vmatprep.subr.mxu0 0.0
    %640 = vmatpush1.msra.mxu0 0.0
    %641 = vmatprep.subr.mxu0 0.0
    %642 = vmatpush1.msra.mxu0 0.0
    %643 = vmatprep.subr.mxu0 0.0
    %644 = vmatpush1.msra.mxu0 %v608
    %645 = vmatprep.subr.mxu0 0.0
    %646 = vmatpush1.msra.mxu0 %v607
    %647 = vmatprep.subr.mxu0 0.0
    %648 = vmatpush1.msra.mxu0 %v606
    %649 = vmatprep.subr.mxu0 0.0
    %650 = vmatpush1.msra.mxu0 %v605
    %651 = vmatprep.subr.mxu0 0.0
    %652 = vmatpush2.msra.mxu0 0.0
    %653 = vmatprep.subr.mxu0 0.0
    %654 = vmatpush2.msra.mxu0 0.0
    %655 = vmatprep.subr.mxu0 0.0
    %656 = vmatpush2.msra.mxu0 0.0
    %657 = vmatprep.subr.mxu0 0.0
    %658 = vmatpush2.msra.mxu0 0.0
    %659 = vmatprep.subr.mxu0 0.0
    %660 = vmatpush2.msra.mxu0 0.0
    %661 = vmatprep.subr.mxu0 0.0
    %662 = vmatpush2.msra.mxu0 0.0
    %663 = vmatprep.subr.mxu0 0.0
    %664 = vmatpush2.msra.mxu0 0.0
    %665 = vmatprep.subr.mxu0 0.0
    %666 = vmatpush2.msra.mxu0 0.0
    %667 = vmatprep.subr.mxu0 0.0
    %668 = vmatpush2.msra.mxu0 0.0
    %669 = vmatprep.subr.mxu0 0.0
    %670 = vmatpush2.msra.mxu0 0.0
    %671 = vmatprep.subr.mxu0 0.0
    %672 = vmatpush2.msra.mxu0 0.0
    %673 = vmatprep.subr.mxu0 0.0
    %674 = vmatpush2.msra.mxu0 0.0
    %675 = vmatprep.subr.mxu0 0.0
    %676 = vmatpush2.msra.mxu0 0.0
    %677 = vmatprep.subr.mxu0 0.0
    %678 = vmatpush2.msra.mxu0 0.0
    %679 = vmatprep.subr.mxu0 0.0
    %680 = vmatpush2.msra.mxu0 0.0
    %681 = vmatprep.subr.mxu0 0.0
    %682 = vmatpush2.msra.mxu0 0.0
    %683 = vmatprep.mubr.f32.mxu0 0.0
    %684 = vmatmul.mubr.f32.gmra.mxu0 %v617
    %v685 = vpop.f32.mrf.mxu0
    %v686 = vadd.f32 0.0, %v685
    %v687 = vpop.f32.mrf.mxu0
    %688 = vdwg.mxu0
    %v691 = vunpack.c.l.s4 1966171168
    %v692 = vunpack.c.0.s8 %v691
    %v693 = vlaneseq
    %v694 = vshrl.u32 %v693, 7
    %v695 = vsub.s32 %v692, %v694
    %v696 = vrot.slane %v602, %v695
    %v697 = vcombine.high %v696, %v696
    %v699 = vunpack.c.l.s4 1966171168
    %v700 = vunpack.c.0.s8 %v699
    %v701 = vlaneseq
    %v702 = vshrl.u32 %v701, 7
    %v703 = vsub.s32 %v700, %v702
    %v704 = vrot.slane %v696, %v703
    %v706 = vunpack.c.l.s4 1966171168
    %v707 = vunpack.c.0.s8 %v706
    %v708 = vlaneseq
    %v709 = vshrl.u32 %v708, 7
    %v710 = vsub.s32 %v707, %v709
    %v711 = vrot.slane %v697, %v710
    %v712 = vld [vmem:[#allocation2] sm:$0xff]
    %v713 = vld [vmem:[#allocation2 + $0x8] sm:$0xff]
    %v714 = vadd.f32 %v314, %v712
    %v715 = vadd.f32 %v319, %v713
    %v716 = vadd.f32 %v324, %v712
    %v717 = vadd.f32 %v329, %v713
    %v718 = vlaneseq
    %v719 = vshrl.u32 %v718, 7
    %v720 = vsub.s32 0, %v719
    %v721 = vrot.slane %v704, %v720
    %v722 = vlaneseq
    %v723 = vshrl.u32 %v722, 7
    %v724 = vsub.s32 0, %v723
    %v725 = vrot.slane %v711, %v724
    %v728 = vmul.f32 %v721, %v714
    %v729 = vmul.f32 %v721, %v715
    %v730 = vmul.f32 %v725, %v716
    %v731 = vmul.f32 %v725, %v717
    %v733 = vsel %vm149, %v728, 0
    %v736 = vsel %vm149, %v729, 0
    %v739 = vsel %vm149, %v730, 0
    %v742 = vsel %vm149, %v731, 0
    %744 = vmatprep.subr.mxu0 0.0
    %745 = vmatpush1.msra.mxu0 0.0
    %746 = vmatprep.subr.mxu0 0.0
    %747 = vmatpush1.msra.mxu0 0.0
    %748 = vmatprep.subr.mxu0 0.0
    %749 = vmatpush1.msra.mxu0 0.0
    %750 = vmatprep.subr.mxu0 0.0
    %751 = vmatpush1.msra.mxu0 0.0
    %752 = vmatprep.subr.mxu0 0.0
    %753 = vmatpush1.msra.mxu0 0.0
    %754 = vmatprep.subr.mxu0 0.0
    %755 = vmatpush1.msra.mxu0 0.0
    %756 = vmatprep.subr.mxu0 0.0
    %757 = vmatpush1.msra.mxu0 0.0
    %758 = vmatprep.subr.mxu0 0.0
    %759 = vmatpush1.msra.mxu0 0.0
    %760 = vmatprep.subr.mxu0 0.0
    %761 = vmatpush1.msra.mxu0 0.0
    %762 = vmatprep.subr.mxu0 0.0
    %763 = vmatpush1.msra.mxu0 0.0
    %764 = vmatprep.subr.mxu0 0.0
    %765 = vmatpush1.msra.mxu0 0.0
    %766 = vmatprep.subr.mxu0 0.0
    %767 = vmatpush1.msra.mxu0 0.0
    %768 = vmatprep.subr.mxu0 0.0
    %769 = vmatpush1.msra.mxu0 %v608
    %770 = vmatprep.subr.mxu0 0.0
    %771 = vmatpush1.msra.mxu0 %v607
    %772 = vmatprep.subr.mxu0 0.0
    %773 = vmatpush1.msra.mxu0 %v606
    %774 = vmatprep.subr.mxu0 0.0
    %775 = vmatpush1.msra.mxu0 %v605
    %776 = vmatprep.subr.mxu0 0.0
    %777 = vmatpush2.msra.mxu0 0.0
    %778 = vmatprep.subr.mxu0 0.0
    %779 = vmatpush2.msra.mxu0 0.0
    %780 = vmatprep.subr.mxu0 0.0
    %781 = vmatpush2.msra.mxu0 0.0
    %782 = vmatprep.subr.mxu0 0.0
    %783 = vmatpush2.msra.mxu0 0.0
    %784 = vmatprep.subr.mxu0 0.0
    %785 = vmatpush2.msra.mxu0 0.0
    %786 = vmatprep.subr.mxu0 0.0
    %787 = vmatpush2.msra.mxu0 0.0
    %788 = vmatprep.subr.mxu0 0.0
    %789 = vmatpush2.msra.mxu0 0.0
    %790 = vmatprep.subr.mxu0 0.0
    %791 = vmatpush2.msra.mxu0 0.0
    %792 = vmatprep.subr.mxu0 0.0
    %793 = vmatpush2.msra.mxu0 0.0
    %794 = vmatprep.subr.mxu0 0.0
    %795 = vmatpush2.msra.mxu0 0.0
    %796 = vmatprep.subr.mxu0 0.0
    %797 = vmatpush2.msra.mxu0 0.0
    %798 = vmatprep.subr.mxu0 0.0
    %799 = vmatpush2.msra.mxu0 0.0
    %800 = vmatprep.subr.mxu0 0.0
    %801 = vmatpush2.msra.mxu0 0.0
    %802 = vmatprep.subr.mxu0 0.0
    %803 = vmatpush2.msra.mxu0 0.0
    %804 = vmatprep.subr.mxu0 0.0
    %805 = vmatpush2.msra.mxu0 0.0
    %806 = vmatprep.subr.mxu0 0.0
    %807 = vmatpush2.msra.mxu0 0.0
    %808 = vmatprep.mubr.f32.mxu0 0.0
    %809 = vmatmul.mubr.f32.gmra.mxu0 %v733
    %v810 = vpop.f32.mrf.mxu0
    %v811 = vadd.f32 0.0, %v810
    %v812 = vpop.f32.mrf.mxu0
    %813 = vmatprep.mubr.f32.mxu0 0.0
    %814 = vmatmul.mubr.f32.gmra.mxu0 %v736
    %v815 = vpop.f32.mrf.mxu0
    %v816 = vadd.f32 0.0, %v815
    %v817 = vpop.f32.mrf.mxu0
    %818 = vmatprep.mubr.f32.mxu0 0.0
    %819 = vmatmul.mubr.f32.gmra.mxu0 %v739
    %v820 = vpop.f32.mrf.mxu0
    %v821 = vadd.f32 0.0, %v820
    %v822 = vpop.f32.mrf.mxu0
    %823 = vmatprep.mubr.f32.mxu0 0.0
    %824 = vmatmul.mubr.f32.gmra.mxu0 %v742
    %v825 = vpop.f32.mrf.mxu0
    %v826 = vadd.f32 0.0, %v825
    %v827 = vpop.f32.mrf.mxu0
    %828 = vdwg.mxu0
    %vm829 = vcmask 31744
    %v830 = vsel %vm829, %v811, -inf
    %v831 = vsel %vm829, %v816, -inf
    %v832 = vmax.f32 %v830, %v831
    %v833 = vrot.slane %v832, 4
    %v834 = vmax.f32 %v832, %v833
    %v835 = vrot.slane %v834, 2
    %v836 = vmax.f32 %v834, %v835
    %v837 = vrot.slane %v836, 1
    %v838 = vmax.f32 %v836, %v837
    %v839 = vsel %vm829, %v821, -inf
    %v840 = vsel %vm829, %v826, -inf
    %v841 = vmax.f32 %v839, %v840
    %v842 = vrot.slane %v841, 4
    %v843 = vmax.f32 %v841, %v842
    %v844 = vrot.slane %v843, 2
    %v845 = vmax.f32 %v843, %v844
    %v846 = vrot.slane %v845, 1
    %v847 = vmax.f32 %v845, %v846
    %v849 = vrot.slane %v686, 1
    %v852 = vmax.f32 %v838, %v686
    %v853 = vmax.f32 %v847, %v849
    %v856 = vrot.slane %v853, 7
    %v857 = vsel %vm531, %v856, %v852
    %v859 = vsub.f32 %v686, %v857
    %v860 = vmul.f32 %v859, 1.442695
    %v861 = vpow.pop %v860
    %v862 = vlaneseq
    %v863 = vshrl.u32 %v862, 7
    %v864 = vsub.s32 0, %v863
    %v865 = vrot.slane %v852, %v864
    %v866 = vlaneseq
    %v867 = vshrl.u32 %v866, 7
    %v868 = vsub.s32 0, %v867
    %v869 = vrot.slane %v853, %v868
    %v870 = vsub.f32 %v811, %v865
    %v871 = vsub.f32 %v816, %v865
    %v872 = vsub.f32 %v821, %v869
    %v873 = vsub.f32 %v826, %v869
    %v874 = vmul.f32 %v870, 1.442695
    %v875 = vpow.pop %v874
    %v876 = vmul.f32 %v871, 1.442695
    %v877 = vpow.pop %v876
    %v878 = vmul.f32 %v872, 1.442695
    %v879 = vpow.pop %v878
    %v880 = vmul.f32 %v873, 1.442695
    %v881 = vpow.pop %v880
    %v882 = vsel %vm829, %v875, 0.0
    %v883 = vsel %vm829, %v877, 0.0
    %v884 = vadd.f32 %v882, %v883
    %v885 = vrot.slane %v884, 4
    %v886 = vadd.f32 %v884, %v885
    %v887 = vrot.slane %v886, 2
    %v888 = vadd.f32 %v886, %v887
    %v889 = vrot.slane %v888, 1
    %v890 = vadd.f32 %v888, %v889
    %v891 = vsel %vm829, %v879, 0.0
    %v892 = vsel %vm829, %v881, 0.0
    %v893 = vadd.f32 %v891, %v892
    %v894 = vrot.slane %v893, 4
    %v895 = vadd.f32 %v893, %v894
    %v896 = vrot.slane %v895, 2
    %v897 = vadd.f32 %v895, %v896
    %v898 = vrot.slane %v897, 1
    %v899 = vadd.f32 %v897, %v898
    %v902 = vsel %vm531, %v899, %v890
    %v904 = vadd.f32 %v861, %v902
    %v905 = vrcp.pop %v904
    %v906 = vmul.f32 1.0, %v905
    %v907 = vmul.f32 %v861, %v906
    %v909 = vsel %vm829, %v907, 0
    %vm911 = vcmask 1043456
    %v913 = vsel %vm911, %v609, 0
    %915 = vmatprep.subr.mxu0 0.0
    %916 = vmatpush1.msra.mxu0 0.0
    %917 = vmatprep.subr.mxu0 0.0
    %918 = vmatpush1.msra.mxu0 0.0
    %919 = vmatprep.subr.mxu0 0.0
    %920 = vmatpush1.msra.mxu0 0.0
    %921 = vmatprep.subr.mxu0 0.0
    %922 = vmatpush1.msra.mxu0 0.0
    %923 = vmatprep.subr.mxu0 0.0
    %924 = vmatpush1.msra.mxu0 0.0
    %925 = vmatprep.subr.mxu0 0.0
    %926 = vmatpush1.msra.mxu0 0.0
    %927 = vmatprep.subr.mxu0 0.0
    %928 = vmatpush1.msra.mxu0 0.0
    %929 = vmatprep.subr.mxu0 0.0
    %930 = vmatpush1.msra.mxu0 0.0
    %931 = vmatprep.subr.mxu0 0.0
    %932 = vmatpush1.msra.mxu0 0.0
    %933 = vmatprep.subr.mxu0 0.0
    %934 = vmatpush1.msra.mxu0 0.0
    %935 = vmatprep.subr.mxu0 0.0
    %936 = vmatpush1.msra.mxu0 0.0
    %937 = vmatprep.subr.mxu0 0.0
    %938 = vmatpush1.msra.mxu0 0.0
    %939 = vmatprep.subr.mxu0 0.0
    %940 = vmatpush1.msra.mxu0 0.0
    %941 = vmatprep.subr.mxu0 0.0
    %942 = vmatpush1.msra.mxu0 0.0
    %943 = vmatprep.subr.mxu0 0.0
    %944 = vmatpush1.msra.mxu0 0.0
    %945 = vmatprep.subr.mxu0 0.0
    %946 = vmatpush1.msra.mxu0 %v913
    %947 = vmatprep.subr.mxu0 0.0
    %948 = vmatpush2.msra.mxu0 0.0
    %949 = vmatprep.subr.mxu0 0.0
    %950 = vmatpush2.msra.mxu0 0.0
    %951 = vmatprep.subr.mxu0 0.0
    %952 = vmatpush2.msra.mxu0 0.0
    %953 = vmatprep.subr.mxu0 0.0
    %954 = vmatpush2.msra.mxu0 0.0
    %955 = vmatprep.subr.mxu0 0.0
    %956 = vmatpush2.msra.mxu0 0.0
    %957 = vmatprep.subr.mxu0 0.0
    %958 = vmatpush2.msra.mxu0 0.0
    %959 = vmatprep.subr.mxu0 0.0
    %960 = vmatpush2.msra.mxu0 0.0
    %961 = vmatprep.subr.mxu0 0.0
    %962 = vmatpush2.msra.mxu0 0.0
    %963 = vmatprep.subr.mxu0 0.0
    %964 = vmatpush2.msra.mxu0 0.0
    %965 = vmatprep.subr.mxu0 0.0
    %966 = vmatpush2.msra.mxu0 0.0
    %967 = vmatprep.subr.mxu0 0.0
    %968 = vmatpush2.msra.mxu0 0.0
    %969 = vmatprep.subr.mxu0 0.0
    %970 = vmatpush2.msra.mxu0 0.0
    %971 = vmatprep.subr.mxu0 0.0
    %972 = vmatpush2.msra.mxu0 0.0
    %973 = vmatprep.subr.mxu0 0.0
    %974 = vmatpush2.msra.mxu0 0.0
    %975 = vmatprep.subr.mxu0 0.0
    %976 = vmatpush2.msra.mxu0 0.0
    %977 = vmatprep.subr.mxu0 0.0
    %978 = vmatpush2.msra.mxu0 0.0
    %979 = vmatprep.mubr.f32.mxu0 0.0
    %980 = vmatmul.mubr.f32.gmra.mxu0 %v909
    %v981 = vpop.f32.mrf.mxu0
    %v982 = vadd.f32 0.0, %v981
    %v983 = vpop.f32.mrf.mxu0
    %984 = vdwg.mxu0
    %v987 = vunpack.c.l.s4 1966171168
    %v988 = vunpack.c.0.s8 %v987
    %v989 = vlaneseq
    %v990 = vshrl.u32 %v989, 7
    %v991 = vsub.s32 %v988, %v990
    %v992 = vrot.slane %v906, %v991
    %v993 = vcombine.high %v992, %v992
    %v995 = vunpack.c.l.s4 1966171168
    %v996 = vunpack.c.0.s8 %v995
    %v997 = vlaneseq
    %v998 = vshrl.u32 %v997, 7
    %v999 = vsub.s32 %v996, %v998
    %v1000 = vrot.slane %v992, %v999
    %v1002 = vunpack.c.l.s4 1966171168
    %v1003 = vunpack.c.0.s8 %v1002
    %v1004 = vlaneseq
    %v1005 = vshrl.u32 %v1004, 7
    %v1006 = vsub.s32 %v1003, %v1005
    %v1007 = vrot.slane %v993, %v1006
    %v1008 = vlaneseq
    %v1009 = vshrl.u32 %v1008, 7
    %v1010 = vsub.s32 0, %v1009
    %v1011 = vrot.slane %v1000, %v1010
    %v1012 = vlaneseq
    %v1013 = vshrl.u32 %v1012, 7
    %v1014 = vsub.s32 0, %v1013
    %v1015 = vrot.slane %v1007, %v1014
    %v1018 = vmul.f32 %v875, %v1011
    %v1019 = vmul.f32 %v877, %v1011
    %v1020 = vmul.f32 %v879, %v1015
    %v1021 = vmul.f32 %v881, %v1015
    %v1023 = vsel %vm829, %v1018, 0
    %v1026 = vsel %vm829, %v1019, 0
    %v1029 = vsel %vm829, %v1020, 0
    %v1032 = vsel %vm829, %v1021, 0
    %1034 = vmatprep.subr.mxu0 0.0
    %1035 = vmatpush1.msra.mxu0 0.0
    %1036 = vmatprep.subr.mxu0 0.0
    %1037 = vmatpush1.msra.mxu0 0.0
    %1038 = vmatprep.subr.mxu0 0.0
    %1039 = vmatpush1.msra.mxu0 0.0
    %1040 = vmatprep.subr.mxu0 0.0
    %1041 = vmatpush1.msra.mxu0 0.0
    %1042 = vmatprep.subr.mxu0 0.0
    %1043 = vmatpush1.msra.mxu0 0.0
    %1044 = vmatprep.subr.mxu0 0.0
    %1045 = vmatpush1.msra.mxu0 0.0
    %1046 = vmatprep.subr.mxu0 0.0
    %1047 = vmatpush1.msra.mxu0 0.0
    %1048 = vmatprep.subr.mxu0 0.0
    %1049 = vmatpush1.msra.mxu0 0.0
    %1050 = vmatprep.subr.mxu0 0.0
    %1051 = vmatpush1.msra.mxu0 0.0
    %1052 = vmatprep.subr.mxu0 0.0
    %1053 = vmatpush1.msra.mxu0 0.0
    %1054 = vmatprep.subr.mxu0 0.0
    %1055 = vmatpush1.msra.mxu0 0.0
    %1056 = vmatprep.subr.mxu0 0.0
    %1057 = vmatpush1.msra.mxu0 0.0
    %1058 = vmatprep.subr.mxu0 0.0
    %1059 = vmatpush1.msra.mxu0 0.0
    %1060 = vmatprep.subr.mxu0 0.0
    %1061 = vmatpush1.msra.mxu0 0.0
    %1062 = vmatprep.subr.mxu0 0.0
    %1063 = vmatpush1.msra.mxu0 0.0
    %1064 = vmatprep.subr.mxu0 0.0
    %1065 = vmatpush1.msra.mxu0 %v913
    %1066 = vmatprep.subr.mxu0 0.0
    %1067 = vmatpush2.msra.mxu0 0.0
    %1068 = vmatprep.subr.mxu0 0.0
    %1069 = vmatpush2.msra.mxu0 0.0
    %1070 = vmatprep.subr.mxu0 0.0
    %1071 = vmatpush2.msra.mxu0 0.0
    %1072 = vmatprep.subr.mxu0 0.0
    %1073 = vmatpush2.msra.mxu0 0.0
    %1074 = vmatprep.subr.mxu0 0.0
    %1075 = vmatpush2.msra.mxu0 0.0
    %1076 = vmatprep.subr.mxu0 0.0
    %1077 = vmatpush2.msra.mxu0 0.0
    %1078 = vmatprep.subr.mxu0 0.0
    %1079 = vmatpush2.msra.mxu0 0.0
    %1080 = vmatprep.subr.mxu0 0.0
    %1081 = vmatpush2.msra.mxu0 0.0
    %1082 = vmatprep.subr.mxu0 0.0
    %1083 = vmatpush2.msra.mxu0 0.0
    %1084 = vmatprep.subr.mxu0 0.0
    %1085 = vmatpush2.msra.mxu0 0.0
    %1086 = vmatprep.subr.mxu0 0.0
    %1087 = vmatpush2.msra.mxu0 0.0
    %1088 = vmatprep.subr.mxu0 0.0
    %1089 = vmatpush2.msra.mxu0 0.0
    %1090 = vmatprep.subr.mxu0 0.0
    %1091 = vmatpush2.msra.mxu0 0.0
    %1092 = vmatprep.subr.mxu0 0.0
    %1093 = vmatpush2.msra.mxu0 0.0
    %1094 = vmatprep.subr.mxu0 0.0
    %1095 = vmatpush2.msra.mxu0 0.0
    %1096 = vmatprep.subr.mxu0 0.0
    %1097 = vmatpush2.msra.mxu0 0.0
    %1098 = vmatprep.mubr.f32.mxu0 0.0
    %1099 = vmatmul.mubr.f32.gmra.mxu0 %v1023
    %v1100 = vpop.f32.mrf.mxu0
    %v1101 = vadd.f32 0.0, %v1100
    %v1102 = vpop.f32.mrf.mxu0
    %1103 = vmatprep.mubr.f32.mxu0 0.0
    %1104 = vmatmul.mubr.f32.gmra.mxu0 %v1026
    %v1105 = vpop.f32.mrf.mxu0
    %v1106 = vadd.f32 0.0, %v1105
    %v1107 = vpop.f32.mrf.mxu0
    %1108 = vmatprep.mubr.f32.mxu0 0.0
    %1109 = vmatmul.mubr.f32.gmra.mxu0 %v1029
    %v1110 = vpop.f32.mrf.mxu0
    %v1111 = vadd.f32 0.0, %v1110
    %v1112 = vpop.f32.mrf.mxu0
    %1113 = vmatprep.mubr.f32.mxu0 0.0
    %1114 = vmatmul.mubr.f32.gmra.mxu0 %v1032
    %v1115 = vpop.f32.mrf.mxu0
    %v1116 = vadd.f32 0.0, %v1115
    %v1117 = vpop.f32.mrf.mxu0
    %1118 = vdwg.mxu0
    %v1119 = vld [vmem:[#allocation5] sm:$0xff]
    %v1120 = vld [vmem:[#allocation5 + $0x8] sm:$0xff]
    %v1121 = vadd.f32 %v229, %v1119
    %v1122 = vadd.f32 %v234, %v1120
    %v1123 = vadd.f32 %v239, %v1119
    %v1124 = vadd.f32 %v244, %v1120
    %v1127 = vrot.slane %v497, 7
    %v1128 = vsel %vm531, %v1127, %v496
    %v1130 = vmul.f32 %v982, %v1128
    %v1131 = vmul.f32 %v1101, %v1121
    %v1132 = vmul.f32 %v1106, %v1122
    %v1133 = vmul.f32 %v1111, %v1123
    %v1134 = vmul.f32 %v1116, %v1124
    %v1135 = vsel %vm149, %v1131, 0.0
    %v1136 = vsel %vm149, %v1132, 0.0
    %v1137 = vadd.f32 %v1135, %v1136
    %v1138 = vrot.slane %v1137, 4
    %v1139 = vadd.f32 %v1137, %v1138
    %v1140 = vrot.slane %v1139, 2
    %v1141 = vadd.f32 %v1139, %v1140
    %v1142 = vrot.slane %v1141, 1
    %v1143 = vadd.f32 %v1141, %v1142
    %v1144 = vsel %vm149, %v1133, 0.0
    %v1145 = vsel %vm149, %v1134, 0.0
    %v1146 = vadd.f32 %v1144, %v1145
    %v1147 = vrot.slane %v1146, 4
    %v1148 = vadd.f32 %v1146, %v1147
    %v1149 = vrot.slane %v1148, 2
    %v1150 = vadd.f32 %v1148, %v1149
    %v1151 = vrot.slane %v1150, 1
    %v1152 = vadd.f32 %v1150, %v1151
    %v1155 = vsel %vm531, %v1152, %v1143
    %v1157 = vadd.f32 %v1130, %v1155
    %v1158 = vld [vmem:[%s13] sm:$0x1]
    %v1160 = vlaneseq
    %v1161 = vshrl.u32 %v1160, 7
    %v1162 = vsub.s32 0, %v1161
    %v1163 = vrot.slane %v1158, %v1162
    %v1166 = vsel %vm149, %v1157, 0
    %1168 = vmatprep.subr.mxu0 0.0
    %1169 = vmatpush1.msra.mxu0 0.0
    %1170 = vmatprep.subr.mxu0 0.0
    %1171 = vmatpush1.msra.mxu0 0.0
    %1172 = vmatprep.subr.mxu0 0.0
    %1173 = vmatpush1.msra.mxu0 0.0
    %1174 = vmatprep.subr.mxu0 0.0
    %1175 = vmatpush1.msra.mxu0 0.0
    %1176 = vmatprep.subr.mxu0 0.0
    %1177 = vmatpush1.msra.mxu0 0.0
    %1178 = vmatprep.subr.mxu0 0.0
    %1179 = vmatpush1.msra.mxu0 0.0
    %1180 = vmatprep.subr.mxu0 0.0
    %1181 = vmatpush1.msra.mxu0 0.0
    %1182 = vmatprep.subr.mxu0 0.0
    %1183 = vmatpush1.msra.mxu0 0.0
    %1184 = vmatprep.subr.mxu0 0.0
    %1185 = vmatpush1.msra.mxu0 0.0
    %1186 = vmatprep.subr.mxu0 0.0
    %1187 = vmatpush1.msra.mxu0 0.0
    %1188 = vmatprep.subr.mxu0 0.0
    %1189 = vmatpush1.msra.mxu0 0.0
    %1190 = vmatprep.subr.mxu0 0.0
    %1191 = vmatpush1.msra.mxu0 0.0
    %1192 = vmatprep.subr.mxu0 0.0
    %1193 = vmatpush1.msra.mxu0 %v148
    %1194 = vmatprep.subr.mxu0 0.0
    %1195 = vmatpush1.msra.mxu0 %v147
    %1196 = vmatprep.subr.mxu0 0.0
    %1197 = vmatpush1.msra.mxu0 %v146
    %1198 = vmatprep.subr.mxu0 0.0
    %1199 = vmatpush1.msra.mxu0 %v145
    %1200 = vmatprep.subr.mxu0 0.0
    %1201 = vmatpush2.msra.mxu0 0.0
    %1202 = vmatprep.subr.mxu0 0.0
    %1203 = vmatpush2.msra.mxu0 0.0
    %1204 = vmatprep.subr.mxu0 0.0
    %1205 = vmatpush2.msra.mxu0 0.0
    %1206 = vmatprep.subr.mxu0 0.0
    %1207 = vmatpush2.msra.mxu0 0.0
    %1208 = vmatprep.subr.mxu0 0.0
    %1209 = vmatpush2.msra.mxu0 0.0
    %1210 = vmatprep.subr.mxu0 0.0
    %1211 = vmatpush2.msra.mxu0 0.0
    %1212 = vmatprep.subr.mxu0 0.0
    %1213 = vmatpush2.msra.mxu0 0.0
    %1214 = vmatprep.subr.mxu0 0.0
    %1215 = vmatpush2.msra.mxu0 0.0
    %1216 = vmatprep.subr.mxu0 0.0
    %1217 = vmatpush2.msra.mxu0 0.0
    %1218 = vmatprep.subr.mxu0 0.0
    %1219 = vmatpush2.msra.mxu0 0.0
    %1220 = vmatprep.subr.mxu0 0.0
    %1221 = vmatpush2.msra.mxu0 0.0
    %1222 = vmatprep.subr.mxu0 0.0
    %1223 = vmatpush2.msra.mxu0 0.0
    %1224 = vmatprep.subr.mxu0 0.0
    %1225 = vmatpush2.msra.mxu0 0.0
    %1226 = vmatprep.subr.mxu0 0.0
    %1227 = vmatpush2.msra.mxu0 0.0
    %1228 = vmatprep.subr.mxu0 0.0
    %1229 = vmatpush2.msra.mxu0 0.0
    %1230 = vmatprep.subr.mxu0 0.0
    %1231 = vmatpush2.msra.mxu0 0.0
    %1232 = vmatprep.mubr.f32.mxu0 0.0
    %1233 = vmatmul.mubr.f32.gmra.mxu0 %v1166
    %v1234 = vpop.f32.mrf.mxu0
    %v1235 = vadd.f32 %v1163, %v1234
    %v1236 = vpop.f32.mrf.mxu0
    %1237 = vdwg.mxu0
    %1238 = vst [vmem:[#allocation13] sm:$0x3] %v1235
    // Predicated region
    $region82: #{tpu_custom_call.1} parent=1 // pred_check
      _
    $region83: #{tpu_custom_call.1} parent=1 // pred_check_branch
      %1240 = sbr.rel (0) target = $region85
    $region84: #{tpu_custom_call.1} parent=1 // pred_region
      %s1242 = ssub.s32 32, 32
      %1243 = vsyncadd [#allocation4], %s1242
      %s1245 = sshll.u32 [#allocation13], 4
      %s1246 = int_to_ptr.vmem [resolvable:$true] %s1245
      %1248 = dma.vmem_to_hbm [thread:$0]  %s1246, 32, %s14, [#allocation4]
    $region85: #{tpu_custom_call.1} parent=1 // pred_fallthru
      _
    // Predicated region
    $region86: #{tpu_custom_call.1} parent=1 // pred_check
      _
    $region87: #{tpu_custom_call.1} parent=1 // pred_check_branch
      %1250 = sbr.rel (0) target = $region89
    $region88: #{tpu_custom_call.1} parent=1 // pred_region
      %s1252 = ssub.s32 512, 512
      %1253 = vsyncadd [#allocation15], %s1252
      %s1254 = sshll.u32 [#allocation14], 4
      %s1255 = int_to_ptr.vmem [resolvable:$true] %s1254
      %1260 = dma.vmem_to_hbm [thread:$0]  %s1255, 512, %s15, [#allocation15], 128, 128, 8
    $region89: #{tpu_custom_call.1} parent=1 // pred_fallthru
      _
    // Predicated region
    $region90: #{tpu_custom_call.1} parent=1 // pred_check
      _
    $region91: #{tpu_custom_call.1} parent=1 // pred_check_branch
      %1262 = sbr.rel (0) target = $region93
    $region92: #{tpu_custom_call.1} parent=1 // pred_region
      %1263 = dma.done [#allocation4], 32
    $region93: #{tpu_custom_call.1} parent=1 // pred_fallthru
      _
    // Predicated region
    $region94: #{tpu_custom_call.1} parent=1 // pred_check
      _
    $region95: #{tpu_custom_call.1} parent=1 // pred_check_branch
      %1265 = sbr.rel (0) target = $region97
    $region96: #{tpu_custom_call.1} parent=1 // pred_region
      %1266 = dma.done [#allocation15], 512
    $region97: #{tpu_custom_call.1} parent=1 // pred_fallthru
      _
    %1267 = vsyncpa [#allocation3], 1
    %1268 = vsyncpa [#allocation6], 1
    %1269 = vsyncpa [#allocation9], 1
    %1270 = vsyncpa [#allocation12], 1
    %1271 = vsyncpa [#allocation4], 1
    %1272 = vsyncpa [#allocation15], 1

</llo_original>
